<compile_context>
chip_gen: v6e
topology: v6e:2x2x1
jax: 0.10.0
libtpu: 0.0.40
codegen_flags: <defaults>
</compile_context>

<pallas_src>
import jax
import jax.numpy as jnp
from jax.experimental import pallas as pl
from jax.experimental.pallas import tpu as pltpu


# ---------------------------------------------------------------------------
# Pallas kernel: fused LRGCN cell for one destination-row tile.
# ---------------------------------------------------------------------------
def lrgcn_kernel(a_ref, scale_ref, xhw_ref, self_ref, c_ref, hc_ref):
    F = c_ref.shape[-1]

    # One lane-dense bf16 MXU matmul (f32 accumulation) per tile.
    agg = jnp.dot(a_ref[...], xhw_ref[...],
                  preferred_element_type=jnp.float32)            # (TM, 4F)
    # Mean normalization as a per-row f32 scale + precomputed root path/bias.
    S = scale_ref[...] * agg + self_ref[...]                     # (TM, 4F)

    I = jax.nn.sigmoid(S[:, 0 * F:1 * F])
    Fg = jax.nn.sigmoid(S[:, 1 * F:2 * F])
    T = jnp.tanh(S[:, 2 * F:3 * F])
    O = jax.nn.sigmoid(S[:, 3 * F:4 * F])

    C_new = Fg * c_ref[...] + I * T
    H_new = O * jnp.tanh(C_new)

    # Single fused (TM, 2F) store (lane-denser than separate H / C / y tiles).
    hc_ref[...] = jnp.concatenate([H_new, C_new], axis=-1)


# ---------------------------------------------------------------------------
# Wrapper glue.
# ---------------------------------------------------------------------------
def build_adjacency_mask(edge_index, edge_type, num_nodes):
    """Edge-count matrix M[dst, src] for relation 0 (exact small ints, bf16)
    and per-destination f32 scale 1/deg_in (0 for isolated destinations).
    M scaled by inv_deg reproduces PyG RGCNConv's scatter-mean aggregation
    (degree counted with edge multiplicity)."""
    src, dst = edge_index[0], edge_index[1]
    mask = (edge_type == 0).astype(jnp.float32)
    M = jnp.zeros((num_nodes, num_nodes), jnp.float32)
    M = M.at[dst, src].add(mask)
    deg = M.sum(axis=1, keepdims=True)
    inv_deg = jnp.where(deg > 0, 1.0 / jnp.where(deg > 0, deg, 1.0), 0.0)
    return M.astype(jnp.bfloat16), inv_deg.astype(jnp.float32)


def _vmem_caps():
    """(physical VMEM bytes, budget to request) — generation aware."""
    phys = 64 * 1024 * 1024
    try:
        info = pltpu.get_tpu_info()
        phys = int(getattr(info, "vmem_capacity_bytes", phys))
    except Exception:
        pass
    if phys > 64 * 1024 * 1024:           # v5e / v6e: 128 MiB per TensorCore
        return phys, 100 * 1024 * 1024
    return phys, 48 * 1024 * 1024         # v7x-class: 64 MiB per TensorCore


def _pick_row_tile(n, budget):
    """Largest row tile dividing n such that the double-buffered bf16 A tile
    fits in ~half the VMEM budget and the parallel grid has >= 2 steps."""
    cands = [t for t in (1024, 512, 256, 128, 64, 32, 16, 8) if n % t == 0]
    for tm in cands:
        if 2 * tm * n * 2 <= budget // 2 and n // tm >= 2:
            return tm
    return cands[-1] if cands else n


def _vmem_limit_bytes(n, tm, f, a_buffers, cap):
    a_tiles = a_buffers * tm * n * 2                  # bf16 A tiles
    xhw = n * 4 * f * 2                               # single-buffered resident
    row_io = 2 * tm * (1 + 4 * f + f + 2 * f) * 4     # scale/SELF/C in + HC out
    need = a_tiles + xhw + row_io
    return int(min(max(2 * need, 16 * 1024 * 1024), cap))


def _spec(shape, index_map, *, buffers=None):
    if buffers is not None:
        try:
            return pl.BlockSpec(shape, index_map,
                                pipeline_mode=pl.Buffered(buffers))
        except TypeError:
            pass
    return pl.BlockSpec(shape, index_map)


def _pack_params(params):
    """Concatenate the 4 gate weights on the output (lane) axis, merge the
    X/H paths on the contraction axis, fold the two per-gate biases."""
    def cat_gates(w):                 # (4, in, F) -> (in, 4F)
        g, cin, f = w.shape
        return jnp.transpose(w, (1, 0, 2)).reshape(cin, g * f)

    wrel = jnp.concatenate([cat_gates(params["wxr"]),
                            cat_gates(params["whr"])], axis=0)   # (L+F, 4F)
    wself = jnp.concatenate([cat_gates(params["wxs"]),
                             cat_gates(params["whs"])], axis=0)  # (L+F, 4F)
    b = (params["bx"] + params["bh"]).reshape(1, -1)             # (1, 4F)
    return wrel, wself, b


def lrgcn_recurrent_gcn(x, edge_index, edge_type, h_0, c_0, params, *, tm=None):
    N, L = x.shape
    F = h_0.shape[1]

    _, budget = _vmem_caps()
    TM = _pick_row_tile(N, budget) if tm is None else tm
    assert N % TM == 0, "row tile must divide N"
    grid_steps = N // TM

    # Adjacency as an exact mask + f32 per-row mean scale.
    A_mask, inv_deg = build_adjacency_mask(edge_index, edge_type, N)

    # Precomputed (reassociated) relation and root paths.
    wrel, wself, b = _pack_params(params)
    XH = jnp.concatenate([x, h_0], axis=1).astype(jnp.float32)   # (N, L+F)
    XHW_rel = (XH @ wrel).astype(jnp.bfloat16)                   # (N, 4F) bf16
    SELF = XH @ wself + b                                        # (N, 4F) f32

    # Deepen A pipelining only when the grid is long enough and VMEM allows.
    a_buffers = 3 if (grid_steps >= 3 and 3 * TM * N * 2 <= budget // 2) else 2

    resident = lambda i: (0, 0)
    row_tile = lambda i: (i, 0)

    hc = pl.pallas_call(
        lrgcn_kernel,
        out_shape=jax.ShapeDtypeStruct((N, 2 * F), jnp.float32),
        grid=(grid_steps,),
        in_specs=[
            _spec((TM, N), row_tile,
                  buffers=a_buffers if a_buffers != 2 else None),   # A mask tile
            _spec((TM, 1), row_tile),                               # 1/deg scale
            _spec((N, 4 * F), resident, buffers=1),                 # XH @ W_rel
            _spec((TM, 4 * F), row_tile),                           # root path + bias
            _spec((TM, F), row_tile),                               # C row tile
        ],
        out_specs=_spec((TM, 2 * F), row_tile),                     # [H' | C'] slab
        compiler_params=pltpu.CompilerParams(
            dimension_semantics=("parallel",),
            vmem_limit_bytes=_vmem_limit_bytes(N, TM, F, a_buffers, budget),
        ),
    )(A_mask, inv_deg, XHW_rel, SELF, c_0)

    H_new = hc[:, :F]
    C_new = hc[:, F:]
    # Tiny Linear(F, 1) head in XLA (keeps kernel stores lane-dense).
    y = jnp.maximum(H_new, 0.0) @ params["wlin"] + params["blin"]
    return y, H_new, C_new          # matches the PyTorch module's return tuple


# ---------------------------------------------------------------------------
# Deterministic params (shapes of LRGCN(lags, filters, 1, 1) + Linear(filters,1)).
# With num_relations=num_bases=1 the basis-decomposed relation weight is a
# single (in, out) matrix per conv (comp scalar folded in).
# ---------------------------------------------------------------------------
def init_params(key, lags, filters):
    ks = jax.random.split(key, 8)
    s = 0.1
    return {
        "wxr": s * jax.random.normal(ks[0], (4, lags, filters), jnp.float32),
        "wxs": s * jax.random.normal(ks[1], (4, lags, filters), jnp.float32),
        "bx":  s * jax.random.normal(ks[2], (4, filters), jnp.float32),
        "whr": s * jax.random.normal(ks[3], (4, filters, filters), jnp.float32),
        "whs": s * jax.random.normal(ks[4], (4, filters, filters), jnp.float32),
        "bh":  s * jax.random.normal(ks[5], (4, filters), jnp.float32),
        "wlin": s * jax.random.normal(ks[6], (filters, 1), jnp.float32),
        "blin": s * jax.random.normal(ks[7], (1,), jnp.float32),
    }


# Pure-JAX f32 reference (per-gate, unpacked) for a correctness check.
def reference_forward(x, edge_index, edge_type, h_0, c_0, params):
    src, dst = edge_index[0], edge_index[1]
    mask = (edge_type == 0).astype(jnp.float32)
    A = jnp.zeros((x.shape[0], x.shape[0]), jnp.float32).at[dst, src].add(mask)
    deg = A.sum(axis=1, keepdims=True)
    A = jnp.where(deg > 0, A / jnp.where(deg > 0, deg, 1.0), 0.0)
    AX, AH = A @ x, A @ h_0

    def pair(g):
        gx = AX @ params["wxr"][g] + x @ params["wxs"][g] + params["bx"][g]
        gh = AH @ params["whr"][g] + h_0 @ params["whs"][g] + params["bh"][g]
        return gx + gh

    I = jax.nn.sigmoid(pair(0))
    Fg = jax.nn.sigmoid(pair(1))
    T = jnp.tanh(pair(2))
    O = jax.nn.sigmoid(pair(3))
    C = Fg * c_0 + I * T
    H = O * jnp.tanh(C)
    y = jnp.maximum(H, 0.0) @ params["wlin"] + params["blin"]
    return y, H, C


if __name__ == "__main__":
    N, LAGS, FILTERS = 512, 4, 32     # lags=4, filters=32 as in the module doc

    key = jax.random.PRNGKey(0)
    k_x, k_h, k_c, k_p, k_e1, k_e2 = jax.random.split(key, 6)

    x = jax.random.normal(k_x, (N, LAGS), jnp.float32)
    h_0 = jax.random.normal(k_h, (N, FILTERS), jnp.float32)
    c_0 = jax.random.normal(k_c, (N, FILTERS), jnp.float32)

    # Bidirectional ring + random extra edges; all edges relation 0.
    idx = jnp.arange(N)
    extra = 2 * N
    src = jnp.concatenate([idx, (idx + 1) % N,
                           jax.random.randint(k_e1, (extra,), 0, N)])
    dst = jnp.concatenate([(idx + 1) % N, idx,
                           jax.random.randint(k_e2, (extra,), 0, N)])
    edge_index = jnp.stack([src, dst], axis=0).astype(jnp.int32)
    # LRGCN forwards the module's 3rd arg ("edge_weight") to RGCNConv as
    # edge_type (relation ids); with num_relations=1 every edge is relation 0.
    edge_type = jnp.zeros((src.shape[0],), jnp.int32)

    params = init_params(k_p, LAGS, FILTERS)

    y, h_new, c_new = lrgcn_recurrent_gcn(x, edge_index, edge_type,
                                          h_0, c_0, params)
    jax.block_until_ready((y, h_new, c_new))

    assert y.shape == (N, 1) and h_new.shape == (N, FILTERS) \
        and c_new.shape == (N, FILTERS)

    # Check against the f32 reference (only bf16 rounding of XH @ W_rel and
    # the exact-mask adjacency matmul differ from pure f32).
    y_ref, h_ref, c_ref = reference_forward(x, edge_index, edge_type,
                                            h_0, c_0, params)
    for got, ref in ((y, y_ref), (h_new, h_ref), (c_new, c_ref)):
        err = float(jnp.max(jnp.abs(got - ref)))
        assert err < 2e-2, f"max abs error {err}"

    print("KERNEL_OK")
</pallas_src>

<mosaic_0001>
module attributes {stable_mosaic.version = 11 : i64} {
  func.func @lrgcn_kernel(%arg0: i32, %arg1: memref<256x512xbf16, #tpu.memory_space<vmem>>, %arg2: memref<256x1xf32, #tpu.memory_space<vmem>>, %arg3: memref<512x128xbf16, #tpu.memory_space<vmem>>, %arg4: memref<256x128xf32, #tpu.memory_space<vmem>>, %arg5: memref<256x32xf32, #tpu.memory_space<vmem>>, %arg6: memref<256x64xf32, #tpu.memory_space<vmem>>) attributes {dimension_semantics = [#tpu.dimension_semantics<parallel>], iteration_bounds = array<i64: 2>, scalar_prefetch = 0 : i64, scratch_operands = 0 : i64, tpu.core_type = #tpu.core_type<tc>, window_params = [{transform_indices = @transform_0, window_bounds = array<i64: 256, 512>}, {transform_indices = @transform_1, window_bounds = array<i64: 256, 1>}, {pipeline_mode = #tpu.pipeline_mode<synchronous>, transform_indices = @transform_2, window_bounds = array<i64: 512, 128>}, {transform_indices = @transform_3, window_bounds = array<i64: 256, 128>}, {transform_indices = @transform_4, window_bounds = array<i64: 256, 32>}, {transform_indices = @transform_5, window_bounds = array<i64: 256, 64>}]} {
    %c0 = arith.constant 0 : index
    %c0_0 = arith.constant 0 : index
    %0 = vector.load %arg1[%c0, %c0_0] : memref<256x512xbf16, #tpu.memory_space<vmem>>, vector<256x512xbf16>
    %c0_1 = arith.constant 0 : index
    %c0_2 = arith.constant 0 : index
    %1 = vector.load %arg3[%c0_1, %c0_2] : memref<512x128xbf16, #tpu.memory_space<vmem>>, vector<512x128xbf16>
    %cst = arith.constant dense<0.000000e+00> : vector<256x128xf32>
    %2 = tpu.matmul %0, %1, %cst {dimension_numbers = #tpu.dot_dimension_numbers<[1], [0], [0], [1], [0, 0, 1, 1], [], []>} : vector<256x512xbf16>, vector<512x128xbf16>, vector<256x128xf32> -> vector<256x128xf32>
    %c0_3 = arith.constant 0 : index
    %c0_4 = arith.constant 0 : index
    %3 = vector.load %arg2[%c0_3, %c0_4] : memref<256x1xf32, #tpu.memory_space<vmem>>, vector<256x1xf32>
    %4 = vector.broadcast %3 : vector<256x1xf32> to vector<256x128xf32>
    %5 = arith.mulf %4, %2 : vector<256x128xf32>
    %c0_5 = arith.constant 0 : index
    %c0_6 = arith.constant 0 : index
    %6 = vector.load %arg4[%c0_5, %c0_6] : memref<256x128xf32, #tpu.memory_space<vmem>>, vector<256x128xf32>
    %7 = arith.addf %5, %6 : vector<256x128xf32>
    %8 = vector.extract_strided_slice %7 {offsets = [0, 0], sizes = [256, 32], strides = [1, 1]} : vector<256x128xf32> to vector<256x32xf32>
    %9 = arith.negf %8 : vector<256x32xf32>
    %10 = math.exp %9 : vector<256x32xf32>
    %cst_7 = arith.constant 1.000000e+00 : f32
    %11 = vector.broadcast %cst_7 : f32 to vector<256x32xf32>
    %12 = arith.addf %11, %10 : vector<256x32xf32>
    %13 = arith.divf %11, %12 : vector<256x32xf32>
    %14 = vector.extract_strided_slice %7 {offsets = [0, 32], sizes = [256, 32], strides = [1, 1]} : vector<256x128xf32> to vector<256x32xf32>
    %15 = arith.negf %14 : vector<256x32xf32>
    %16 = math.exp %15 : vector<256x32xf32>
    %cst_8 = arith.constant 1.000000e+00 : f32
    %17 = vector.broadcast %cst_8 : f32 to vector<256x32xf32>
    %18 = arith.addf %17, %16 : vector<256x32xf32>
    %19 = arith.divf %17, %18 : vector<256x32xf32>
    %20 = vector.extract_strided_slice %7 {offsets = [0, 64], sizes = [256, 32], strides = [1, 1]} : vector<256x128xf32> to vector<256x32xf32>
    %21 = math.tanh %20 : vector<256x32xf32>
    %22 = vector.extract_strided_slice %7 {offsets = [0, 96], sizes = [256, 32], strides = [1, 1]} : vector<256x128xf32> to vector<256x32xf32>
    %23 = arith.negf %22 : vector<256x32xf32>
    %24 = math.exp %23 : vector<256x32xf32>
    %cst_9 = arith.constant 1.000000e+00 : f32
    %25 = vector.broadcast %cst_9 : f32 to vector<256x32xf32>
    %26 = arith.addf %25, %24 : vector<256x32xf32>
    %27 = arith.divf %25, %26 : vector<256x32xf32>
    %c0_10 = arith.constant 0 : index
    %c0_11 = arith.constant 0 : index
    %28 = vector.load %arg5[%c0_10, %c0_11] : memref<256x32xf32, #tpu.memory_space<vmem>>, vector<256x32xf32>
    %29 = arith.mulf %19, %28 : vector<256x32xf32>
    %30 = arith.mulf %13, %21 : vector<256x32xf32>
    %31 = arith.addf %29, %30 : vector<256x32xf32>
    %32 = math.tanh %31 : vector<256x32xf32>
    %33 = arith.mulf %27, %32 : vector<256x32xf32>
    %34 = tpu.concatenate %33, %31 in 1 : vector<256x32xf32>, vector<256x32xf32> -> vector<256x64xf32>
    %c0_12 = arith.constant 0 : index
    %c0_13 = arith.constant 0 : index
    %35 = vector.load %arg6[%c0_12, %c0_13] : memref<256x64xf32, #tpu.memory_space<vmem>>, vector<256x64xf32>
    tpu.vector_store %arg6[%c0_12, %c0_13], %34 {strides = array<i32>} : memref<256x64xf32, #tpu.memory_space<vmem>>, vector<256x64xf32>,
    return
  }
  func.func @transform_0(%arg0: i32) -> (i32, i32) {
    %c0_i32 = arith.constant 0 : i32
    %c0_i32_0 = arith.constant 0 : i32
    return %arg0, %c0_i32 : i32, i32
  }
  func.func @transform_1(%arg0: i32) -> (i32, i32) {
    %c0_i32 = arith.constant 0 : i32
    %c0_i32_0 = arith.constant 0 : i32
    return %arg0, %c0_i32 : i32, i32
  }
  func.func @transform_2(%arg0: i32) -> (i32, i32) {
    %c0_i32 = arith.constant 0 : i32
    %c0_i32_0 = arith.constant 0 : i32
    %c0_i32_1 = arith.constant 0 : i32
    return %c0_i32, %c0_i32_0 : i32, i32
  }
  func.func @transform_3(%arg0: i32) -> (i32, i32) {
    %c0_i32 = arith.constant 0 : i32
    %c0_i32_0 = arith.constant 0 : i32
    return %arg0, %c0_i32 : i32, i32
  }
  func.func @transform_4(%arg0: i32) -> (i32, i32) {
    %c0_i32 = arith.constant 0 : i32
    %c0_i32_0 = arith.constant 0 : i32
    return %arg0, %c0_i32 : i32, i32
  }
  func.func @transform_5(%arg0: i32) -> (i32, i32) {
    %c0_i32 = arith.constant 0 : i32
    %c0_i32_0 = arith.constant 0 : i32
    return %arg0, %c0_i32 : i32, i32
  }
}

</mosaic_0001>

<llo_original>
// kernel: tpu_custom_call.1
$region0: #{tpu_custom_call.1}
  #allocation0 [shape = 'u32[]', space=smem, size = 0x4, offset = 0x4, fixed_abs, tag = 'smem constant byte address 0x4 - core index']
  #allocation1 [shape = 'u32[144,128]{1,0:T(1,128)}', space=vmem, size = 0x12000, scoped, tag = 'internal scratch']
  %s0 = inlined_call_operand.vmem [shape: bf16[512,512], index: 0, kind: input, shape index: {}]
  %s1 = inlined_call_operand.vmem [shape: f32[512,1], index: 1, kind: input, shape index: {}]
  %s2 = inlined_call_operand.hbm [shape: bf16[512,128], index: 2, kind: input, shape index: {}]
  %s3 = inlined_call_operand.hbm [shape: f32[512,128], index: 3, kind: input, shape index: {}]
  %s4 = inlined_call_operand.vmem [shape: f32[512,32], index: 4, kind: input, shape index: {}]
  %s5 = inlined_call_operand.vmem [shape: f32[512,64], index: 5, kind: output, shape index: {}]
  %s6 = sld [smem:[#allocation0]]
  $region61: #{tpu_custom_call.1} parent=0
    _
  %s8 = ssub.s32 1, %s6
  %s9 = scalar_select 0, %s8, %s6
  $region1: #{tpu_custom_call.1} parent=0
    #allocation2 [shape = 'u8[131072]{0}', space=vmem, size = 0x20000, scoped, tag = 'input window, operand 2, single buffered']
    #allocation3 [shape = 's32[2]{0}', space=sflag, size = 0x8, scoped, tag = 'scoped memory for tpu_custom_call.1']
    #allocation4 [shape = 'u8[262144]{0}', space=vmem, size = 0x40000, scoped, tag = 'input window, operand 3']
    #allocation5 [shape = 's32[2]{0}', space=sflag, size = 0x8, scoped, tag = 'scoped memory for tpu_custom_call.1']
    %10 = vsyncpa [#allocation3], 0
    %11 = vsyncpa [#allocation5], 0
    %s12 = scalar_lea.sflag [#allocation5], 1
    %13 = vsyncpa %s12, 0
    loop: start=0, step=1, limit=4
    $region2: #{tpu_custom_call.1} parent=1 // loop_pre_header
      _
    $region3: #{tpu_custom_call.1} parent=1 // loop_header
      %s15 = sphi 0, %s19
      %p16 = scmp.ge.s32.totalorder %s15, 4
      %s25 = sphi 0, %s27
      %s28 = sphi 0, %s25
      %s29 = sphi 0, %s28
      %s45 = sphi 0, %s29
      %s51 = sphi 0, %s53
      %s54 = sphi 0, %s51
      %s55 = sphi 0, %s54
      %s71 = sphi 0, %s55
      %s75 = sphi 0, %s75
      %s77 = sphi 0, %s75
      %s78 = sphi 0, %s77
      %s92 = sphi 0, %s78
      %s98 = sphi 0, %s100
      %s101 = sphi 0, %s98
      %s102 = sphi 0, %s101
      %s118 = sphi 0, %s102
      %s124 = sphi 0, %s126
      %s127 = sphi 0, %s124
      %s128 = sphi 0, %s127
      %s144 = sphi 0, %s128
      %s150 = sphi 0, %s152
      %s153 = sphi 0, %s150
      %s154 = sphi 0, %s153
      %s170 = sphi 0, %s154
    $region4: #{tpu_custom_call.1} parent=1 // loop_header_branch
      %18 = sbr.rel (%p16) target = $region8
    $region5: #{tpu_custom_call.1} parent=1 // loop_body
      %s20 = ssub.s32 %s15, 1
      %s21 = ssub.s32 %s15, 2
      %s22 = sadd.s32 %s15, 1
      %s23 = ssub.s32 %s15, %s22
      %p24 = scmp.eq.s32.totalorder %s23, 0
      %s26 = sadd.s32 %s25, 1
      %s27 = scalar_select %p24, %s25, %s26
      %p30 = pneg %p24
      %p31 = scmp.eq.s32.totalorder %s15, 1
      %p32 = por %p30, %p31
      %p33 = scmp.ne.s32.totalorder %s25, %s28
      %p34 = scmp.eq.s32.totalorder %s15, 0
      %p35 = por %p33, %p34
      %p36 = scmp.ne.s32.totalorder %s25, %s28
      %p37 = scmp.eq.s32.totalorder %s20, 1
      %p38 = por %p36, %p37
      %p39 = scmp.ne.s32.totalorder %s28, %s29
      %p40 = scmp.eq.s32.totalorder %s20, 0
      %p41 = por %p39, %p40
      %p42 = scmp.ne.s32.totalorder %s28, %s29
      %p43 = scmp.eq.s32.totalorder %s21, 1
      %p44 = por %p42, %p43
      %p46 = scmp.ne.s32.totalorder %s29, %s45
      %p47 = scmp.eq.s32.totalorder %s21, 0
      %p48 = por %p46, %p47
      %s49 = ssub.s32 %s15, %s22
      %p50 = scmp.eq.s32.totalorder %s49, 0
      %s52 = sadd.s32 %s51, 1
      %s53 = scalar_select %p50, %s51, %s52
      %p56 = pneg %p50
      %p57 = scmp.eq.s32.totalorder %s15, 1
      %p58 = por %p56, %p57
      %p59 = scmp.ne.s32.totalorder %s51, %s54
      %p60 = scmp.eq.s32.totalorder %s15, 0
      %p61 = por %p59, %p60
      %p62 = scmp.ne.s32.totalorder %s51, %s54
      %p63 = scmp.eq.s32.totalorder %s20, 1
      %p64 = por %p62, %p63
      %p65 = scmp.ne.s32.totalorder %s54, %s55
      %p66 = scmp.eq.s32.totalorder %s20, 0
      %p67 = por %p65, %p66
      %p68 = scmp.ne.s32.totalorder %s54, %s55
      %p69 = scmp.eq.s32.totalorder %s21, 1
      %p70 = por %p68, %p69
      %p72 = scmp.ne.s32.totalorder %s55, %s71
      %p73 = scmp.eq.s32.totalorder %s21, 0
      %p74 = por %p72, %p73
      %s76 = sadd.s32 %s75, 1
      %p79 = scmp.eq.s32.totalorder %s15, 1
      %p80 = scmp.ne.s32.totalorder %s75, %s77
      %p81 = scmp.eq.s32.totalorder %s15, 0
      %p82 = por %p80, %p81
      %p83 = scmp.ne.s32.totalorder %s75, %s77
      %p84 = scmp.eq.s32.totalorder %s20, 1
      %p85 = por %p83, %p84
      %p86 = scmp.ne.s32.totalorder %s77, %s78
      %p87 = scmp.eq.s32.totalorder %s20, 0
      %p88 = por %p86, %p87
      %p89 = scmp.ne.s32.totalorder %s77, %s78
      %p90 = scmp.eq.s32.totalorder %s21, 1
      %p91 = por %p89, %p90
      %p93 = scmp.ne.s32.totalorder %s78, %s92
      %p94 = scmp.eq.s32.totalorder %s21, 0
      %p95 = por %p93, %p94
      %s96 = ssub.s32 %s15, %s22
      %p97 = scmp.eq.s32.totalorder %s96, 0
      %s99 = sadd.s32 %s98, 1
      %s100 = scalar_select %p97, %s98, %s99
      %p103 = pneg %p97
      %p104 = scmp.eq.s32.totalorder %s15, 1
      %p105 = por %p103, %p104
      %p106 = scmp.ne.s32.totalorder %s98, %s101
      %p107 = scmp.eq.s32.totalorder %s15, 0
      %p108 = por %p106, %p107
      %p109 = scmp.ne.s32.totalorder %s98, %s101
      %p110 = scmp.eq.s32.totalorder %s20, 1
      %p111 = por %p109, %p110
      %p112 = scmp.ne.s32.totalorder %s101, %s102
      %p113 = scmp.eq.s32.totalorder %s20, 0
      %p114 = por %p112, %p113
      %p115 = scmp.ne.s32.totalorder %s101, %s102
      %p116 = scmp.eq.s32.totalorder %s21, 1
      %p117 = por %p115, %p116
      %p119 = scmp.ne.s32.totalorder %s102, %s118
      %p120 = scmp.eq.s32.totalorder %s21, 0
      %p121 = por %p119, %p120
      %s122 = ssub.s32 %s15, %s22
      %p123 = scmp.eq.s32.totalorder %s122, 0
      %s125 = sadd.s32 %s124, 1
      %s126 = scalar_select %p123, %s124, %s125
      %p129 = pneg %p123
      %p130 = scmp.eq.s32.totalorder %s15, 1
      %p131 = por %p129, %p130
      %p132 = scmp.ne.s32.totalorder %s124, %s127
      %p133 = scmp.eq.s32.totalorder %s15, 0
      %p134 = por %p132, %p133
      %p135 = scmp.ne.s32.totalorder %s124, %s127
      %p136 = scmp.eq.s32.totalorder %s20, 1
      %p137 = por %p135, %p136
      %p138 = scmp.ne.s32.totalorder %s127, %s128
      %p139 = scmp.eq.s32.totalorder %s20, 0
      %p140 = por %p138, %p139
      %p141 = scmp.ne.s32.totalorder %s127, %s128
      %p142 = scmp.eq.s32.totalorder %s21, 1
      %p143 = por %p141, %p142
      %p145 = scmp.ne.s32.totalorder %s128, %s144
      %p146 = scmp.eq.s32.totalorder %s21, 0
      %p147 = por %p145, %p146
      %s148 = ssub.s32 %s15, %s22
      %p149 = scmp.eq.s32.totalorder %s148, 0
      %s151 = sadd.s32 %s150, 1
      %s152 = scalar_select %p149, %s150, %s151
      %p155 = pneg %p149
      %p156 = scmp.eq.s32.totalorder %s15, 1
      %p157 = por %p155, %p156
      %p158 = scmp.ne.s32.totalorder %s150, %s153
      %p159 = scmp.eq.s32.totalorder %s15, 0
      %p160 = por %p158, %p159
      %p161 = scmp.ne.s32.totalorder %s150, %s153
      %p162 = scmp.eq.s32.totalorder %s20, 1
      %p163 = por %p161, %p162
      %p164 = scmp.ne.s32.totalorder %s153, %s154
      %p165 = scmp.eq.s32.totalorder %s20, 0
      %p166 = por %p164, %p165
      %p167 = scmp.ne.s32.totalorder %s153, %s154
      %p168 = scmp.eq.s32.totalorder %s21, 1
      %p169 = por %p167, %p168
      %p171 = scmp.ne.s32.totalorder %s154, %s170
      %p172 = scmp.eq.s32.totalorder %s21, 0
      %p173 = por %p171, %p172
      %p174 = scmp.le.s32.totalorder 1, %s15
      %p175 = scmp.lt.s32.totalorder %s15, 3
      %p176 = pnand %p174, %p175
      %p177 = pneg %p176
      // Predicated region
      $region9: #{tpu_custom_call.1} parent=5 // pred_check
        _
      $region10: #{tpu_custom_call.1} parent=5 // pred_check_branch
        %179 = sbr.rel (%p176) target = $region12
      $region11: #{tpu_custom_call.1} parent=5 // pred_region
        %s180 = ssub.s32 %s15, 1
        // Predicated region
        $region13: #{tpu_custom_call.1} parent=11 // pred_check
          %p181 = pneg %p88
        $region14: #{tpu_custom_call.1} parent=11 // pred_check_branch
          %183 = sbr.rel (%p181) target = $region16
        $region15: #{tpu_custom_call.1} parent=11 // pred_region
          %s185 = ssub.s32 4096, 4096
          %186 = vsyncadd [#allocation3], %s185
          %s187 = sshll.u32 [#allocation2], 4
          %s188 = int_to_ptr.vmem [resolvable:$true] %s187
          %193 = dma.hbm_to_vmem [thread:$0]  %s2, 4096, %s188, [#allocation3], 64, 64, 4
        $region16: #{tpu_custom_call.1} parent=11 // pred_fallthru
          _
      $region12: #{tpu_custom_call.1} parent=5 // pred_fallthru
        _
      %p194 = scmp.lt.s32.totalorder %s15, 2
      // Predicated region
      $region17: #{tpu_custom_call.1} parent=5 // pred_check
        %p195 = pneg %p194
      $region18: #{tpu_custom_call.1} parent=5 // pred_check_branch
        %197 = sbr.rel (%p195) target = $region20
      $region19: #{tpu_custom_call.1} parent=5 // pred_region
        // Predicated region
        $region21: #{tpu_custom_call.1} parent=19 // pred_check
          %p198 = pneg %p35
        $region22: #{tpu_custom_call.1} parent=19 // pred_check_branch
          %200 = sbr.rel (%p198) target = $region24
        $region23: #{tpu_custom_call.1} parent=19 // pred_region
          %s201 = smul.u32 32, %s15
          %p202 = scmp.lt.s32.totalorder %s201, 63
          %s203 = scalar_select %p202, %s201, 63
          %s204 = smul.addr %s203, 4
          %s205 = smul.addr %s204, 4
          %s206 = scalar_lea.vmem %s0, %s205
          %s207 = smul.u32 32, %s15
        $region24: #{tpu_custom_call.1} parent=19 // pred_fallthru
          _
        // Predicated region
        $region25: #{tpu_custom_call.1} parent=19 // pred_check
          %p208 = pneg %p61
        $region26: #{tpu_custom_call.1} parent=19 // pred_check_branch
          %210 = sbr.rel (%p208) target = $region28
        $region27: #{tpu_custom_call.1} parent=19 // pred_region
          %s211 = smul.u32 32, %s15
          %p212 = scmp.lt.s32.totalorder %s211, 63
          %s213 = scalar_select %p212, %s211, 63
          %s214 = smul.addr %s213, 8
          %s215 = scalar_lea.vmem %s1, %s214
          %s216 = smul.u32 32, %s15
        $region28: #{tpu_custom_call.1} parent=19 // pred_fallthru
          _
        // Predicated region
        $region29: #{tpu_custom_call.1} parent=19 // pred_check
          %p217 = pneg %p108
        $region30: #{tpu_custom_call.1} parent=19 // pred_check_branch
          %219 = sbr.rel (%p217) target = $region32
        $region31: #{tpu_custom_call.1} parent=19 // pred_region
          %s220 = sand.u32 %s98, 1
          %s221 = scalar_lea.sflag [#allocation5], %s220
          %s222 = sand.u32 %s98, 1
          %s223 = smul.addr %s222, 256
          %s224 = scalar_lea.vmem [#allocation4], %s223
          %s225 = smul.u32 32, %s15
          %s227 = ssub.s32 4096, 4096
          %228 = vsyncadd %s221, %s227
          %s229 = smul.addr %s225, 128
          %s230 = scalar_lea.hbm %s3, %s229
          %s231 = sshll.u32 %s224, 4
          %s232 = int_to_ptr.vmem [resolvable:$true] %s231
          %237 = dma.hbm_to_vmem [thread:$0]  %s230, 4096, %s232, %s221, 128, 128, 8
        $region32: #{tpu_custom_call.1} parent=19 // pred_fallthru
          _
        // Predicated region
        $region33: #{tpu_custom_call.1} parent=19 // pred_check
          %p238 = pneg %p134
        $region34: #{tpu_custom_call.1} parent=19 // pred_check_branch
          %240 = sbr.rel (%p238) target = $region36
        $region35: #{tpu_custom_call.1} parent=19 // pred_region
          %s241 = smul.u32 32, %s15
          %p242 = scmp.lt.s32.totalorder %s241, 63
          %s243 = scalar_select %p242, %s241, 63
          %s244 = smul.addr %s243, 8
          %s245 = scalar_lea.vmem %s4, %s244
          %s246 = smul.u32 32, %s15
        $region36: #{tpu_custom_call.1} parent=19 // pred_fallthru
          _
      $region20: #{tpu_custom_call.1} parent=5 // pred_fallthru
        _
      %p247 = scmp.le.s32.totalorder 1, %s15
      %p248 = scmp.lt.s32.totalorder %s15, 3
      %p249 = pnand %p247, %p248
      %p250 = pneg %p249
      // Predicated region
      $region37: #{tpu_custom_call.1} parent=5 // pred_check
        _
      $region38: #{tpu_custom_call.1} parent=5 // pred_check_branch
        %252 = sbr.rel (%p249) target = $region40
      $region39: #{tpu_custom_call.1} parent=5 // pred_region
        %s253 = ssub.s32 %s15, 1
        // Predicated region
        $region41: #{tpu_custom_call.1} parent=39 // pred_check
          %p254 = pneg %p88
        $region42: #{tpu_custom_call.1} parent=39 // pred_check_branch
          %256 = sbr.rel (%p254) target = $region44
        $region43: #{tpu_custom_call.1} parent=39 // pred_region
          %257 = dma.done [#allocation3], 4096
        $region44: #{tpu_custom_call.1} parent=39 // pred_fallthru
          _
        %s258 = sand.u32 %s101, 1
        %s259 = scalar_lea.sflag [#allocation5], %s258
        %s260 = sand.u32 %s101, 1
        %s261 = smul.addr %s260, 256
        %s262 = scalar_lea.vmem [#allocation4], %s261
        // Predicated region
        $region45: #{tpu_custom_call.1} parent=39 // pred_check
          %p263 = pneg %p114
        $region46: #{tpu_custom_call.1} parent=39 // pred_check_branch
          %265 = sbr.rel (%p263) target = $region48
        $region47: #{tpu_custom_call.1} parent=39 // pred_region
          %266 = dma.done %s259, 4096
        $region48: #{tpu_custom_call.1} parent=39 // pred_fallthru
          _
        %s267 = smul.u32 32, %s20
        %p268 = scmp.lt.s32.totalorder %s267, 63
        %s269 = scalar_select %p268, %s267, 63
        %s270 = smul.addr %s269, 4
        %s271 = smul.addr %s270, 4
        %s272 = scalar_lea.vmem %s0, %s271
        %p273 = pneg %p41
        %p274 = pneg %p38
        %s275 = smul.u32 32, %s20
        %p276 = scmp.lt.s32.totalorder %s275, 63
        %s277 = scalar_select %p276, %s275, 63
        %s278 = smul.addr %s277, 8
        %s279 = scalar_lea.vmem %s1, %s278
        %p280 = pneg %p67
        %p281 = pneg %p64
        %p282 = pneg %p88
        %p283 = pneg %p85
        %s284 = sand.u32 %s101, 1
        %s285 = scalar_lea.sflag [#allocation5], %s284
        %s286 = sand.u32 %s101, 1
        %s287 = smul.addr %s286, 256
        %s288 = scalar_lea.vmem [#allocation4], %s287
        %p289 = pneg %p114
        %p290 = pneg %p111
        %s291 = smul.u32 32, %s20
        %p292 = scmp.lt.s32.totalorder %s291, 63
        %s293 = scalar_select %p292, %s291, 63
        %s294 = smul.addr %s293, 8
        %s295 = scalar_lea.vmem %s4, %s294
        %p296 = pneg %p140
        %p297 = pneg %p137
        %p298 = pneg %p166
        %p299 = pneg %p163
        %s300 = smul.u32 32, %s20
        %p301 = scmp.lt.s32.totalorder %s300, 63
        %s302 = scalar_select %p301, %s300, 63
        %s303 = smul.addr %s302, 8
        %s304 = scalar_lea.vmem %s5, %s303
        %s305 = smul.u32 32, %s20
        %p306 = scmp.lt.s32.totalorder %s305, 63
        %s307 = scalar_select %p306, %s305, 63
        %s308 = smul.addr %s307, 4
        %s309 = smul.addr %s308, 4
        %s310 = scalar_lea.vmem %s0, %s309
        %s311 = smul.u32 32, %s20
        %s312 = smul.u32 32, %s20
        %p313 = scmp.lt.s32.totalorder %s312, 63
        %s314 = scalar_select %p313, %s312, 63
        %s315 = smul.addr %s314, 8
        %s316 = scalar_lea.vmem %s1, %s315
        %s317 = smul.u32 32, %s20
        %s318 = smul.u32 32, %s20
        %s319 = smul.u32 32, %s20
        %p320 = scmp.lt.s32.totalorder %s319, 63
        %s321 = scalar_select %p320, %s319, 63
        %s322 = smul.addr %s321, 8
        %s323 = scalar_lea.vmem %s4, %s322
        %s324 = smul.u32 32, %s20
        %s325 = smul.u32 32, %s20
        %p326 = scmp.lt.s32.totalorder %s325, 63
        %s327 = scalar_select %p326, %s325, 63
        %s328 = smul.addr %s327, 8
        %s329 = scalar_lea.vmem %s5, %s328
        %s330 = smul.u32 32, %s20
        %v332 = vld [vmem:[%s310] sm:$0xff]
        %v333 = vld [vmem:[%s310 + $0x8] sm:$0xff]
        %v334 = vld [vmem:[%s310 + $0x10] sm:$0xff]
        %v335 = vld [vmem:[%s310 + $0x18] sm:$0xff]
        %v336 = vld [vmem:[%s310 + $0x20] sm:$0xff]
        %v337 = vld [vmem:[%s310 + $0x28] sm:$0xff]
        %v338 = vld [vmem:[%s310 + $0x30] sm:$0xff]
        %v339 = vld [vmem:[%s310 + $0x38] sm:$0xff]
        %v340 = vld [vmem:[%s310 + $0x40] sm:$0xff]
        %v341 = vld [vmem:[%s310 + $0x48] sm:$0xff]
        %v342 = vld [vmem:[%s310 + $0x50] sm:$0xff]
        %v343 = vld [vmem:[%s310 + $0x58] sm:$0xff]
        %v344 = vld [vmem:[%s310 + $0x60] sm:$0xff]
        %v345 = vld [vmem:[%s310 + $0x68] sm:$0xff]
        %v346 = vld [vmem:[%s310 + $0x70] sm:$0xff]
        %v347 = vld [vmem:[%s310 + $0x78] sm:$0xff]
        %v348 = vld [vmem:[%s310 + $0x80] sm:$0xff]
        %v349 = vld [vmem:[%s310 + $0x88] sm:$0xff]
        %v350 = vld [vmem:[%s310 + $0x90] sm:$0xff]
        %v351 = vld [vmem:[%s310 + $0x98] sm:$0xff]
        %v352 = vld [vmem:[%s310 + $0xa0] sm:$0xff]
        %v353 = vld [vmem:[%s310 + $0xa8] sm:$0xff]
        %v354 = vld [vmem:[%s310 + $0xb0] sm:$0xff]
        %v355 = vld [vmem:[%s310 + $0xb8] sm:$0xff]
        %v356 = vld [vmem:[%s310 + $0xc0] sm:$0xff]
        %v357 = vld [vmem:[%s310 + $0xc8] sm:$0xff]
        %v358 = vld [vmem:[%s310 + $0xd0] sm:$0xff]
        %v359 = vld [vmem:[%s310 + $0xd8] sm:$0xff]
        %v360 = vld [vmem:[%s310 + $0xe0] sm:$0xff]
        %v361 = vld [vmem:[%s310 + $0xe8] sm:$0xff]
        %v362 = vld [vmem:[%s310 + $0xf0] sm:$0xff]
        %v363 = vld [vmem:[%s310 + $0xf8] sm:$0xff]
        %v364 = vld [vmem:[%s310 + $0x100] sm:$0xff]
        %v365 = vld [vmem:[%s310 + $0x108] sm:$0xff]
        %v366 = vld [vmem:[%s310 + $0x110] sm:$0xff]
        %v367 = vld [vmem:[%s310 + $0x118] sm:$0xff]
        %v368 = vld [vmem:[%s310 + $0x120] sm:$0xff]
        %v369 = vld [vmem:[%s310 + $0x128] sm:$0xff]
        %v370 = vld [vmem:[%s310 + $0x130] sm:$0xff]
        %v371 = vld [vmem:[%s310 + $0x138] sm:$0xff]
        %v372 = vld [vmem:[%s310 + $0x140] sm:$0xff]
        %v373 = vld [vmem:[%s310 + $0x148] sm:$0xff]
        %v374 = vld [vmem:[%s310 + $0x150] sm:$0xff]
        %v375 = vld [vmem:[%s310 + $0x158] sm:$0xff]
        %v376 = vld [vmem:[%s310 + $0x160] sm:$0xff]
        %v377 = vld [vmem:[%s310 + $0x168] sm:$0xff]
        %v378 = vld [vmem:[%s310 + $0x170] sm:$0xff]
        %v379 = vld [vmem:[%s310 + $0x178] sm:$0xff]
        %v380 = vld [vmem:[%s310 + $0x180] sm:$0xff]
        %v381 = vld [vmem:[%s310 + $0x188] sm:$0xff]
        %v382 = vld [vmem:[%s310 + $0x190] sm:$0xff]
        %v383 = vld [vmem:[%s310 + $0x198] sm:$0xff]
        %v384 = vld [vmem:[%s310 + $0x1a0] sm:$0xff]
        %v385 = vld [vmem:[%s310 + $0x1a8] sm:$0xff]
        %v386 = vld [vmem:[%s310 + $0x1b0] sm:$0xff]
        %v387 = vld [vmem:[%s310 + $0x1b8] sm:$0xff]
        %v388 = vld [vmem:[%s310 + $0x1c0] sm:$0xff]
        %v389 = vld [vmem:[%s310 + $0x1c8] sm:$0xff]
        %v390 = vld [vmem:[%s310 + $0x1d0] sm:$0xff]
        %v391 = vld [vmem:[%s310 + $0x1d8] sm:$0xff]
        %v392 = vld [vmem:[%s310 + $0x1e0] sm:$0xff]
        %v393 = vld [vmem:[%s310 + $0x1e8] sm:$0xff]
        %v394 = vld [vmem:[%s310 + $0x1f0] sm:$0xff]
        %v395 = vld [vmem:[%s310 + $0x1f8] sm:$0xff]
        %v396 = vld [vmem:[#allocation2] sm:$0xf]
        %v397 = vld [vmem:[#allocation2 + $0x4] sm:$0xf]
        %v398 = vld [vmem:[#allocation2 + $0x8] sm:$0xf]
        %v399 = vld [vmem:[#allocation2 + $0xc] sm:$0xf]
        %v400 = vld [vmem:[#allocation2 + $0x10] sm:$0xf]
        %v401 = vld [vmem:[#allocation2 + $0x14] sm:$0xf]
        %v402 = vld [vmem:[#allocation2 + $0x18] sm:$0xf]
        %v403 = vld [vmem:[#allocation2 + $0x1c] sm:$0xf]
        %v404 = vld [vmem:[#allocation2 + $0x20] sm:$0xf]
        %v405 = vld [vmem:[#allocation2 + $0x24] sm:$0xf]
        %v406 = vld [vmem:[#allocation2 + $0x28] sm:$0xf]
        %v407 = vld [vmem:[#allocation2 + $0x2c] sm:$0xf]
        %v408 = vld [vmem:[#allocation2 + $0x30] sm:$0xf]
        %v409 = vld [vmem:[#allocation2 + $0x34] sm:$0xf]
        %v410 = vld [vmem:[#allocation2 + $0x38] sm:$0xf]
        %v411 = vld [vmem:[#allocation2 + $0x3c] sm:$0xf]
        %v412 = vld [vmem:[#allocation2 + $0x40] sm:$0xf]
        %v413 = vld [vmem:[#allocation2 + $0x44] sm:$0xf]
        %v414 = vld [vmem:[#allocation2 + $0x48] sm:$0xf]
        %v415 = vld [vmem:[#allocation2 + $0x4c] sm:$0xf]
        %v416 = vld [vmem:[#allocation2 + $0x50] sm:$0xf]
        %v417 = vld [vmem:[#allocation2 + $0x54] sm:$0xf]
        %v418 = vld [vmem:[#allocation2 + $0x58] sm:$0xf]
        %v419 = vld [vmem:[#allocation2 + $0x5c] sm:$0xf]
        %v420 = vld [vmem:[#allocation2 + $0x60] sm:$0xf]
        %v421 = vld [vmem:[#allocation2 + $0x64] sm:$0xf]
        %v422 = vld [vmem:[#allocation2 + $0x68] sm:$0xf]
        %v423 = vld [vmem:[#allocation2 + $0x6c] sm:$0xf]
        %v424 = vld [vmem:[#allocation2 + $0x70] sm:$0xf]
        %v425 = vld [vmem:[#allocation2 + $0x74] sm:$0xf]
        %v426 = vld [vmem:[#allocation2 + $0x78] sm:$0xf]
        %v427 = vld [vmem:[#allocation2 + $0x7c] sm:$0xf]
        %v428 = vld [vmem:[#allocation2 + $0x80] sm:$0xf]
        %v429 = vld [vmem:[#allocation2 + $0x84] sm:$0xf]
        %v430 = vld [vmem:[#allocation2 + $0x88] sm:$0xf]
        %v431 = vld [vmem:[#allocation2 + $0x8c] sm:$0xf]
        %v432 = vld [vmem:[#allocation2 + $0x90] sm:$0xf]
        %v433 = vld [vmem:[#allocation2 + $0x94] sm:$0xf]
        %v434 = vld [vmem:[#allocation2 + $0x98] sm:$0xf]
        %v435 = vld [vmem:[#allocation2 + $0x9c] sm:$0xf]
        %v436 = vld [vmem:[#allocation2 + $0xa0] sm:$0xf]
        %v437 = vld [vmem:[#allocation2 + $0xa4] sm:$0xf]
        %v438 = vld [vmem:[#allocation2 + $0xa8] sm:$0xf]
        %v439 = vld [vmem:[#allocation2 + $0xac] sm:$0xf]
        %v440 = vld [vmem:[#allocation2 + $0xb0] sm:$0xf]
        %v441 = vld [vmem:[#allocation2 + $0xb4] sm:$0xf]
        %v442 = vld [vmem:[#allocation2 + $0xb8] sm:$0xf]
        %v443 = vld [vmem:[#allocation2 + $0xbc] sm:$0xf]
        %v444 = vld [vmem:[#allocation2 + $0xc0] sm:$0xf]
        %v445 = vld [vmem:[#allocation2 + $0xc4] sm:$0xf]
        %v446 = vld [vmem:[#allocation2 + $0xc8] sm:$0xf]
        %v447 = vld [vmem:[#allocation2 + $0xcc] sm:$0xf]
        %v448 = vld [vmem:[#allocation2 + $0xd0] sm:$0xf]
        %v449 = vld [vmem:[#allocation2 + $0xd4] sm:$0xf]
        %v450 = vld [vmem:[#allocation2 + $0xd8] sm:$0xf]
        %v451 = vld [vmem:[#allocation2 + $0xdc] sm:$0xf]
        %v452 = vld [vmem:[#allocation2 + $0xe0] sm:$0xf]
        %v453 = vld [vmem:[#allocation2 + $0xe4] sm:$0xf]
        %v454 = vld [vmem:[#allocation2 + $0xe8] sm:$0xf]
        %v455 = vld [vmem:[#allocation2 + $0xec] sm:$0xf]
        %v456 = vld [vmem:[#allocation2 + $0xf0] sm:$0xf]
        %v457 = vld [vmem:[#allocation2 + $0xf4] sm:$0xf]
        %v458 = vld [vmem:[#allocation2 + $0xf8] sm:$0xf]
        %v459 = vld [vmem:[#allocation2 + $0xfc] sm:$0xf]
        %v524 = vunpack.c.l.b16 %v332
        %v525 = vunpack.c.h.b16 %v332
        %v526 = vunpack.c.l.b16 %v333
        %v527 = vunpack.c.h.b16 %v333
        %v528 = vunpack.c.l.b16 %v334
        %v529 = vunpack.c.h.b16 %v334
        %v530 = vunpack.c.l.b16 %v335
        %v531 = vunpack.c.h.b16 %v335
        %v532 = vunpack.c.l.b16 %v336
        %v533 = vunpack.c.h.b16 %v336
        %v534 = vunpack.c.l.b16 %v337
        %v535 = vunpack.c.h.b16 %v337
        %v536 = vunpack.c.l.b16 %v338
        %v537 = vunpack.c.h.b16 %v338
        %v538 = vunpack.c.l.b16 %v339
        %v539 = vunpack.c.h.b16 %v339
        %v540 = vunpack.c.l.b16 %v340
        %v541 = vunpack.c.h.b16 %v340
        %v542 = vunpack.c.l.b16 %v341
        %v543 = vunpack.c.h.b16 %v341
        %v544 = vunpack.c.l.b16 %v342
        %v545 = vunpack.c.h.b16 %v342
        %v546 = vunpack.c.l.b16 %v343
        %v547 = vunpack.c.h.b16 %v343
        %v548 = vunpack.c.l.b16 %v344
        %v549 = vunpack.c.h.b16 %v344
        %v550 = vunpack.c.l.b16 %v345
        %v551 = vunpack.c.h.b16 %v345
        %v552 = vunpack.c.l.b16 %v346
        %v553 = vunpack.c.h.b16 %v346
        %v554 = vunpack.c.l.b16 %v347
        %v555 = vunpack.c.h.b16 %v347
        %v556 = vunpack.c.l.b16 %v348
        %v557 = vunpack.c.h.b16 %v348
        %v558 = vunpack.c.l.b16 %v349
        %v559 = vunpack.c.h.b16 %v349
        %v560 = vunpack.c.l.b16 %v350
        %v561 = vunpack.c.h.b16 %v350
        %v562 = vunpack.c.l.b16 %v351
        %v563 = vunpack.c.h.b16 %v351
        %v564 = vunpack.c.l.b16 %v352
        %v565 = vunpack.c.h.b16 %v352
        %v566 = vunpack.c.l.b16 %v353
        %v567 = vunpack.c.h.b16 %v353
        %v568 = vunpack.c.l.b16 %v354
        %v569 = vunpack.c.h.b16 %v354
        %v570 = vunpack.c.l.b16 %v355
        %v571 = vunpack.c.h.b16 %v355
        %v572 = vunpack.c.l.b16 %v356
        %v573 = vunpack.c.h.b16 %v356
        %v574 = vunpack.c.l.b16 %v357
        %v575 = vunpack.c.h.b16 %v357
        %v576 = vunpack.c.l.b16 %v358
        %v577 = vunpack.c.h.b16 %v358
        %v578 = vunpack.c.l.b16 %v359
        %v579 = vunpack.c.h.b16 %v359
        %v580 = vunpack.c.l.b16 %v360
        %v581 = vunpack.c.h.b16 %v360
        %v582 = vunpack.c.l.b16 %v361
        %v583 = vunpack.c.h.b16 %v361
        %v584 = vunpack.c.l.b16 %v362
        %v585 = vunpack.c.h.b16 %v362
        %v586 = vunpack.c.l.b16 %v363
        %v587 = vunpack.c.h.b16 %v363
        %v588 = vunpack.c.l.b16 %v364
        %v589 = vunpack.c.h.b16 %v364
        %v590 = vunpack.c.l.b16 %v365
        %v591 = vunpack.c.h.b16 %v365
        %v592 = vunpack.c.l.b16 %v366
        %v593 = vunpack.c.h.b16 %v366
        %v594 = vunpack.c.l.b16 %v367
        %v595 = vunpack.c.h.b16 %v367
        %v596 = vunpack.c.l.b16 %v368
        %v597 = vunpack.c.h.b16 %v368
        %v598 = vunpack.c.l.b16 %v369
        %v599 = vunpack.c.h.b16 %v369
        %v600 = vunpack.c.l.b16 %v370
        %v601 = vunpack.c.h.b16 %v370
        %v602 = vunpack.c.l.b16 %v371
        %v603 = vunpack.c.h.b16 %v371
        %v604 = vunpack.c.l.b16 %v372
        %v605 = vunpack.c.h.b16 %v372
        %v606 = vunpack.c.l.b16 %v373
        %v607 = vunpack.c.h.b16 %v373
        %v608 = vunpack.c.l.b16 %v374
        %v609 = vunpack.c.h.b16 %v374
        %v610 = vunpack.c.l.b16 %v375
        %v611 = vunpack.c.h.b16 %v375
        %v612 = vunpack.c.l.b16 %v376
        %v613 = vunpack.c.h.b16 %v376
        %v614 = vunpack.c.l.b16 %v377
        %v615 = vunpack.c.h.b16 %v377
        %v616 = vunpack.c.l.b16 %v378
        %v617 = vunpack.c.h.b16 %v378
        %v618 = vunpack.c.l.b16 %v379
        %v619 = vunpack.c.h.b16 %v379
        %v620 = vunpack.c.l.b16 %v380
        %v621 = vunpack.c.h.b16 %v380
        %v622 = vunpack.c.l.b16 %v381
        %v623 = vunpack.c.h.b16 %v381
        %v624 = vunpack.c.l.b16 %v382
        %v625 = vunpack.c.h.b16 %v382
        %v626 = vunpack.c.l.b16 %v383
        %v627 = vunpack.c.h.b16 %v383
        %v628 = vunpack.c.l.b16 %v384
        %v629 = vunpack.c.h.b16 %v384
        %v630 = vunpack.c.l.b16 %v385
        %v631 = vunpack.c.h.b16 %v385
        %v632 = vunpack.c.l.b16 %v386
        %v633 = vunpack.c.h.b16 %v386
        %v634 = vunpack.c.l.b16 %v387
        %v635 = vunpack.c.h.b16 %v387
        %v636 = vunpack.c.l.b16 %v388
        %v637 = vunpack.c.h.b16 %v388
        %v638 = vunpack.c.l.b16 %v389
        %v639 = vunpack.c.h.b16 %v389
        %v640 = vunpack.c.l.b16 %v390
        %v641 = vunpack.c.h.b16 %v390
        %v642 = vunpack.c.l.b16 %v391
        %v643 = vunpack.c.h.b16 %v391
        %v644 = vunpack.c.l.b16 %v392
        %v645 = vunpack.c.h.b16 %v392
        %v646 = vunpack.c.l.b16 %v393
        %v647 = vunpack.c.h.b16 %v393
        %v648 = vunpack.c.l.b16 %v394
        %v649 = vunpack.c.h.b16 %v394
        %v650 = vunpack.c.l.b16 %v395
        %v651 = vunpack.c.h.b16 %v395
        %v652 = vpack.c.b16 %v528, %v524
        %v653 = vpack.c.b16 %v529, %v525
        %v654 = vpack.c.b16 %v530, %v526
        %v655 = vpack.c.b16 %v531, %v527
        %v656 = vpack.c.b16 %v536, %v532
        %v657 = vpack.c.b16 %v537, %v533
        %v658 = vpack.c.b16 %v538, %v534
        %v659 = vpack.c.b16 %v539, %v535
        %v660 = vpack.c.b16 %v544, %v540
        %v661 = vpack.c.b16 %v545, %v541
        %v662 = vpack.c.b16 %v546, %v542
        %v663 = vpack.c.b16 %v547, %v543
        %v664 = vpack.c.b16 %v552, %v548
        %v665 = vpack.c.b16 %v553, %v549
        %v666 = vpack.c.b16 %v554, %v550
        %v667 = vpack.c.b16 %v555, %v551
        %v668 = vpack.c.b16 %v560, %v556
        %v669 = vpack.c.b16 %v561, %v557
        %v670 = vpack.c.b16 %v562, %v558
        %v671 = vpack.c.b16 %v563, %v559
        %v672 = vpack.c.b16 %v568, %v564
        %v673 = vpack.c.b16 %v569, %v565
        %v674 = vpack.c.b16 %v570, %v566
        %v675 = vpack.c.b16 %v571, %v567
        %v676 = vpack.c.b16 %v576, %v572
        %v677 = vpack.c.b16 %v577, %v573
        %v678 = vpack.c.b16 %v578, %v574
        %v679 = vpack.c.b16 %v579, %v575
        %v680 = vpack.c.b16 %v584, %v580
        %v681 = vpack.c.b16 %v585, %v581
        %v682 = vpack.c.b16 %v586, %v582
        %v683 = vpack.c.b16 %v587, %v583
        %v684 = vpack.c.b16 %v592, %v588
        %v685 = vpack.c.b16 %v593, %v589
        %v686 = vpack.c.b16 %v594, %v590
        %v687 = vpack.c.b16 %v595, %v591
        %v688 = vpack.c.b16 %v600, %v596
        %v689 = vpack.c.b16 %v601, %v597
        %v690 = vpack.c.b16 %v602, %v598
        %v691 = vpack.c.b16 %v603, %v599
        %v692 = vpack.c.b16 %v608, %v604
        %v693 = vpack.c.b16 %v609, %v605
        %v694 = vpack.c.b16 %v610, %v606
        %v695 = vpack.c.b16 %v611, %v607
        %v696 = vpack.c.b16 %v616, %v612
        %v697 = vpack.c.b16 %v617, %v613
        %v698 = vpack.c.b16 %v618, %v614
        %v699 = vpack.c.b16 %v619, %v615
        %v700 = vpack.c.b16 %v624, %v620
        %v701 = vpack.c.b16 %v625, %v621
        %v702 = vpack.c.b16 %v626, %v622
        %v703 = vpack.c.b16 %v627, %v623
        %v704 = vpack.c.b16 %v632, %v628
        %v705 = vpack.c.b16 %v633, %v629
        %v706 = vpack.c.b16 %v634, %v630
        %v707 = vpack.c.b16 %v635, %v631
        %v708 = vpack.c.b16 %v640, %v636
        %v709 = vpack.c.b16 %v641, %v637
        %v710 = vpack.c.b16 %v642, %v638
        %v711 = vpack.c.b16 %v643, %v639
        %v712 = vpack.c.b16 %v648, %v644
        %v713 = vpack.c.b16 %v649, %v645
        %v714 = vpack.c.b16 %v650, %v646
        %v715 = vpack.c.b16 %v651, %v647
        %v844 = vunpack.c.l.b16 %v396
        %v845 = vunpack.c.l.b16 %v397
        %v846 = vunpack.c.l.b16 %v398
        %v847 = vunpack.c.l.b16 %v399
        %v848 = vunpack.c.l.b16 %v400
        %v849 = vunpack.c.l.b16 %v401
        %v850 = vunpack.c.l.b16 %v402
        %v851 = vunpack.c.l.b16 %v403
        %v852 = vunpack.c.l.b16 %v404
        %v853 = vunpack.c.l.b16 %v405
        %v854 = vunpack.c.l.b16 %v406
        %v855 = vunpack.c.l.b16 %v407
        %v856 = vunpack.c.l.b16 %v408
        %v857 = vunpack.c.l.b16 %v409
        %v858 = vunpack.c.l.b16 %v410
        %v859 = vunpack.c.l.b16 %v411
        %v860 = vunpack.c.l.b16 %v412
        %v861 = vunpack.c.l.b16 %v413
        %v862 = vunpack.c.l.b16 %v414
        %v863 = vunpack.c.l.b16 %v415
        %v864 = vunpack.c.l.b16 %v416
        %v865 = vunpack.c.l.b16 %v417
        %v866 = vunpack.c.l.b16 %v418
        %v867 = vunpack.c.l.b16 %v419
        %v868 = vunpack.c.l.b16 %v420
        %v869 = vunpack.c.l.b16 %v421
        %v870 = vunpack.c.l.b16 %v422
        %v871 = vunpack.c.l.b16 %v423
        %v872 = vunpack.c.l.b16 %v424
        %v873 = vunpack.c.l.b16 %v425
        %v874 = vunpack.c.l.b16 %v426
        %v875 = vunpack.c.l.b16 %v427
        %v876 = vunpack.c.l.b16 %v428
        %v877 = vunpack.c.l.b16 %v429
        %v878 = vunpack.c.l.b16 %v430
        %v879 = vunpack.c.l.b16 %v431
        %v880 = vunpack.c.l.b16 %v432
        %v881 = vunpack.c.l.b16 %v433
        %v882 = vunpack.c.l.b16 %v434
        %v883 = vunpack.c.l.b16 %v435
        %v884 = vunpack.c.l.b16 %v436
        %v885 = vunpack.c.l.b16 %v437
        %v886 = vunpack.c.l.b16 %v438
        %v887 = vunpack.c.l.b16 %v439
        %v888 = vunpack.c.l.b16 %v440
        %v889 = vunpack.c.l.b16 %v441
        %v890 = vunpack.c.l.b16 %v442
        %v891 = vunpack.c.l.b16 %v443
        %v892 = vunpack.c.l.b16 %v444
        %v893 = vunpack.c.l.b16 %v445
        %v894 = vunpack.c.l.b16 %v446
        %v895 = vunpack.c.l.b16 %v447
        %v896 = vunpack.c.l.b16 %v448
        %v897 = vunpack.c.l.b16 %v449
        %v898 = vunpack.c.l.b16 %v450
        %v899 = vunpack.c.l.b16 %v451
        %v900 = vunpack.c.l.b16 %v452
        %v901 = vunpack.c.l.b16 %v453
        %v902 = vunpack.c.l.b16 %v454
        %v903 = vunpack.c.l.b16 %v455
        %v904 = vunpack.c.l.b16 %v456
        %v905 = vunpack.c.l.b16 %v457
        %v906 = vunpack.c.l.b16 %v458
        %v907 = vunpack.c.l.b16 %v459
        %v908 = vpack.c.b16 %v845, %v844
        %v909 = vpack.c.b16 %v847, %v846
        %v910 = vpack.c.b16 %v849, %v848
        %v911 = vpack.c.b16 %v851, %v850
        %v912 = vpack.c.b16 %v853, %v852
        %v913 = vpack.c.b16 %v855, %v854
        %v914 = vpack.c.b16 %v857, %v856
        %v915 = vpack.c.b16 %v859, %v858
        %v916 = vpack.c.b16 %v861, %v860
        %v917 = vpack.c.b16 %v863, %v862
        %v918 = vpack.c.b16 %v865, %v864
        %v919 = vpack.c.b16 %v867, %v866
        %v920 = vpack.c.b16 %v869, %v868
        %v921 = vpack.c.b16 %v871, %v870
        %v922 = vpack.c.b16 %v873, %v872
        %v923 = vpack.c.b16 %v875, %v874
        %v924 = vpack.c.b16 %v877, %v876
        %v925 = vpack.c.b16 %v879, %v878
        %v926 = vpack.c.b16 %v881, %v880
        %v927 = vpack.c.b16 %v883, %v882
        %v928 = vpack.c.b16 %v885, %v884
        %v929 = vpack.c.b16 %v887, %v886
        %v930 = vpack.c.b16 %v889, %v888
        %v931 = vpack.c.b16 %v891, %v890
        %v932 = vpack.c.b16 %v893, %v892
        %v933 = vpack.c.b16 %v895, %v894
        %v934 = vpack.c.b16 %v897, %v896
        %v935 = vpack.c.b16 %v899, %v898
        %v936 = vpack.c.b16 %v901, %v900
        %v937 = vpack.c.b16 %v903, %v902
        %v938 = vpack.c.b16 %v905, %v904
        %v939 = vpack.c.b16 %v907, %v906
        %972 = vmatprep.subr.bf16.mxu0 0
        %973 = vmatpush1.bf16.msra.mxu0 %v915
        %974 = vmatprep.subr.bf16.mxu0 0
        %975 = vmatpush1.bf16.msra.mxu0 %v914
        %976 = vmatprep.subr.bf16.mxu0 0
        %977 = vmatpush1.bf16.msra.mxu0 %v913
        %978 = vmatprep.subr.bf16.mxu0 0
        %979 = vmatpush1.bf16.msra.mxu0 %v912
        %980 = vmatprep.subr.bf16.mxu0 0
        %981 = vmatpush1.bf16.msra.mxu0 %v911
        %982 = vmatprep.subr.bf16.mxu0 0
        %983 = vmatpush1.bf16.msra.mxu0 %v910
        %984 = vmatprep.subr.bf16.mxu0 0
        %985 = vmatpush1.bf16.msra.mxu0 %v909
        %986 = vmatprep.subr.bf16.mxu0 0
        %987 = vmatpush1.bf16.msra.mxu0 %v908
        %988 = vmatprep.subr.bf16.mxu0 0
        %989 = vmatpush2.bf16.msra.mxu0 %v923
        %990 = vmatprep.subr.bf16.mxu0 0
        %991 = vmatpush2.bf16.msra.mxu0 %v922
        %992 = vmatprep.subr.bf16.mxu0 0
        %993 = vmatpush2.bf16.msra.mxu0 %v921
        %994 = vmatprep.subr.bf16.mxu0 0
        %995 = vmatpush2.bf16.msra.mxu0 %v920
        %996 = vmatprep.subr.bf16.mxu0 0
        %997 = vmatpush2.bf16.msra.mxu0 %v919
        %998 = vmatprep.subr.bf16.mxu0 0
        %999 = vmatpush2.bf16.msra.mxu0 %v918
        %1000 = vmatprep.subr.bf16.mxu0 0
        %1001 = vmatpush2.bf16.msra.mxu0 %v917
        %1002 = vmatprep.subr.bf16.mxu0 0
        %1003 = vmatpush2.bf16.msra.mxu0 %v916
        %1004 = vmatprep.mubr.bf16.mxu0 %v653
        %1005 = vmatmul.mubr.bf16.gmra.mxu0 %v652
        %v1006 = vpop.f32.mrf.mxu0
        %v1007 = vadd.f32 0.0, %v1006
        %v1008 = vpop.f32.mrf.mxu0
        %v1009 = vpop.f32.mrf.mxu0
        %v1010 = vadd.f32 0.0, %v1009
        %v1011 = vpop.f32.mrf.mxu0
        %1012 = vmatprep.mubr.bf16.mxu0 %v657
        %1013 = vmatmul.mubr.bf16.gmra.mxu0 %v656
        %v1014 = vpop.f32.mrf.mxu0
        %v1015 = vadd.f32 0.0, %v1014
        %v1016 = vpop.f32.mrf.mxu0
        %v1017 = vpop.f32.mrf.mxu0
        %v1018 = vadd.f32 0.0, %v1017
        %v1019 = vpop.f32.mrf.mxu0
        %1020 = vmatprep.mubr.bf16.mxu0 %v661
        %1021 = vmatmul.mubr.bf16.gmra.mxu0 %v660
        %v1022 = vpop.f32.mrf.mxu0
        %v1023 = vadd.f32 0.0, %v1022
        %v1024 = vpop.f32.mrf.mxu0
        %v1025 = vpop.f32.mrf.mxu0
        %v1026 = vadd.f32 0.0, %v1025
        %v1027 = vpop.f32.mrf.mxu0
        %1028 = vmatprep.mubr.bf16.mxu0 %v665
        %1029 = vmatmul.mubr.bf16.gmra.mxu0 %v664
        %v1030 = vpop.f32.mrf.mxu0
        %v1031 = vadd.f32 0.0, %v1030
        %v1032 = vpop.f32.mrf.mxu0
        %v1033 = vpop.f32.mrf.mxu0
        %v1034 = vadd.f32 0.0, %v1033
        %v1035 = vpop.f32.mrf.mxu0
        %1036 = vmatprep.mubr.bf16.mxu0 %v669
        %1037 = vmatmul.mubr.bf16.gmra.mxu0 %v668
        %v1038 = vpop.f32.mrf.mxu0
        %v1039 = vadd.f32 0.0, %v1038
        %v1040 = vpop.f32.mrf.mxu0
        %v1041 = vpop.f32.mrf.mxu0
        %v1042 = vadd.f32 0.0, %v1041
        %v1043 = vpop.f32.mrf.mxu0
        %1044 = vmatprep.mubr.bf16.mxu0 %v673
        %1045 = vmatmul.mubr.bf16.gmra.mxu0 %v672
        %v1046 = vpop.f32.mrf.mxu0
        %v1047 = vadd.f32 0.0, %v1046
        %v1048 = vpop.f32.mrf.mxu0
        %v1049 = vpop.f32.mrf.mxu0
        %v1050 = vadd.f32 0.0, %v1049
        %v1051 = vpop.f32.mrf.mxu0
        %1052 = vmatprep.mubr.bf16.mxu0 %v677
        %1053 = vmatmul.mubr.bf16.gmra.mxu0 %v676
        %v1054 = vpop.f32.mrf.mxu0
        %v1055 = vadd.f32 0.0, %v1054
        %v1056 = vpop.f32.mrf.mxu0
        %v1057 = vpop.f32.mrf.mxu0
        %v1058 = vadd.f32 0.0, %v1057
        %v1059 = vpop.f32.mrf.mxu0
        %1060 = vmatprep.mubr.bf16.mxu0 %v681
        %1061 = vmatmul.mubr.bf16.gmra.mxu0 %v680
        %v1062 = vpop.f32.mrf.mxu0
        %v1063 = vadd.f32 0.0, %v1062
        %v1064 = vpop.f32.mrf.mxu0
        %v1065 = vpop.f32.mrf.mxu0
        %v1066 = vadd.f32 0.0, %v1065
        %v1067 = vpop.f32.mrf.mxu0
        %1068 = vmatprep.mubr.bf16.mxu0 %v685
        %1069 = vmatmul.mubr.bf16.gmra.mxu0 %v684
        %v1070 = vpop.f32.mrf.mxu0
        %v1071 = vadd.f32 0.0, %v1070
        %v1072 = vpop.f32.mrf.mxu0
        %v1073 = vpop.f32.mrf.mxu0
        %v1074 = vadd.f32 0.0, %v1073
        %v1075 = vpop.f32.mrf.mxu0
        %1076 = vmatprep.mubr.bf16.mxu0 %v689
        %1077 = vmatmul.mubr.bf16.gmra.mxu0 %v688
        %v1078 = vpop.f32.mrf.mxu0
        %v1079 = vadd.f32 0.0, %v1078
        %v1080 = vpop.f32.mrf.mxu0
        %v1081 = vpop.f32.mrf.mxu0
        %v1082 = vadd.f32 0.0, %v1081
        %v1083 = vpop.f32.mrf.mxu0
        %1084 = vmatprep.mubr.bf16.mxu0 %v693
        %1085 = vmatmul.mubr.bf16.gmra.mxu0 %v692
        %v1086 = vpop.f32.mrf.mxu0
        %v1087 = vadd.f32 0.0, %v1086
        %v1088 = vpop.f32.mrf.mxu0
        %v1089 = vpop.f32.mrf.mxu0
        %v1090 = vadd.f32 0.0, %v1089
        %v1091 = vpop.f32.mrf.mxu0
        %1092 = vmatprep.mubr.bf16.mxu0 %v697
        %1093 = vmatmul.mubr.bf16.gmra.mxu0 %v696
        %v1094 = vpop.f32.mrf.mxu0
        %v1095 = vadd.f32 0.0, %v1094
        %v1096 = vpop.f32.mrf.mxu0
        %v1097 = vpop.f32.mrf.mxu0
        %v1098 = vadd.f32 0.0, %v1097
        %v1099 = vpop.f32.mrf.mxu0
        %1100 = vmatprep.mubr.bf16.mxu0 %v701
        %1101 = vmatmul.mubr.bf16.gmra.mxu0 %v700
        %v1102 = vpop.f32.mrf.mxu0
        %v1103 = vadd.f32 0.0, %v1102
        %v1104 = vpop.f32.mrf.mxu0
        %v1105 = vpop.f32.mrf.mxu0
        %v1106 = vadd.f32 0.0, %v1105
        %v1107 = vpop.f32.mrf.mxu0
        %1108 = vmatprep.mubr.bf16.mxu0 %v705
        %1109 = vmatmul.mubr.bf16.gmra.mxu0 %v704
        %v1110 = vpop.f32.mrf.mxu0
        %v1111 = vadd.f32 0.0, %v1110
        %v1112 = vpop.f32.mrf.mxu0
        %v1113 = vpop.f32.mrf.mxu0
        %v1114 = vadd.f32 0.0, %v1113
        %v1115 = vpop.f32.mrf.mxu0
        %1116 = vmatprep.mubr.bf16.mxu0 %v709
        %1117 = vmatmul.mubr.bf16.gmra.mxu0 %v708
        %v1118 = vpop.f32.mrf.mxu0
        %v1119 = vadd.f32 0.0, %v1118
        %v1120 = vpop.f32.mrf.mxu0
        %v1121 = vpop.f32.mrf.mxu0
        %v1122 = vadd.f32 0.0, %v1121
        %v1123 = vpop.f32.mrf.mxu0
        %1124 = vmatprep.mubr.bf16.mxu0 %v713
        %1125 = vmatmul.mubr.bf16.gmra.mxu0 %v712
        %v1126 = vpop.f32.mrf.mxu0
        %v1127 = vadd.f32 0.0, %v1126
        %v1128 = vpop.f32.mrf.mxu0
        %v1129 = vpop.f32.mrf.mxu0
        %v1130 = vadd.f32 0.0, %v1129
        %v1131 = vpop.f32.mrf.mxu0
        %1132 = vdwg.mxu0
        %1133 = vmatprep.subr.bf16.mxu0 0
        %1134 = vmatpush1.bf16.msra.mxu0 %v931
        %1135 = vmatprep.subr.bf16.mxu0 0
        %1136 = vmatpush1.bf16.msra.mxu0 %v930
        %1137 = vmatprep.subr.bf16.mxu0 0
        %1138 = vmatpush1.bf16.msra.mxu0 %v929
        %1139 = vmatprep.subr.bf16.mxu0 0
        %1140 = vmatpush1.bf16.msra.mxu0 %v928
        %1141 = vmatprep.subr.bf16.mxu0 0
        %1142 = vmatpush1.bf16.msra.mxu0 %v927
        %1143 = vmatprep.subr.bf16.mxu0 0
        %1144 = vmatpush1.bf16.msra.mxu0 %v926
        %1145 = vmatprep.subr.bf16.mxu0 0
        %1146 = vmatpush1.bf16.msra.mxu0 %v925
        %1147 = vmatprep.subr.bf16.mxu0 0
        %1148 = vmatpush1.bf16.msra.mxu0 %v924
        %1149 = vmatprep.subr.bf16.mxu0 0
        %1150 = vmatpush2.bf16.msra.mxu0 %v939
        %1151 = vmatprep.subr.bf16.mxu0 0
        %1152 = vmatpush2.bf16.msra.mxu0 %v938
        %1153 = vmatprep.subr.bf16.mxu0 0
        %1154 = vmatpush2.bf16.msra.mxu0 %v937
        %1155 = vmatprep.subr.bf16.mxu0 0
        %1156 = vmatpush2.bf16.msra.mxu0 %v936
        %1157 = vmatprep.subr.bf16.mxu0 0
        %1158 = vmatpush2.bf16.msra.mxu0 %v935
        %1159 = vmatprep.subr.bf16.mxu0 0
        %1160 = vmatpush2.bf16.msra.mxu0 %v934
        %1161 = vmatprep.subr.bf16.mxu0 0
        %1162 = vmatpush2.bf16.msra.mxu0 %v933
        %1163 = vmatprep.subr.bf16.mxu0 0
        %1164 = vmatpush2.bf16.msra.mxu0 %v932
        %1165 = vmatprep.mubr.bf16.mxu0 %v655
        %1166 = vmatmul.mubr.bf16.gmra.mxu0 %v654
        %v1167 = vpop.f32.mrf.mxu0
        %v1168 = vadd.f32 %v1007, %v1167
        %v1169 = vpop.f32.mrf.mxu0
        %v1170 = vpop.f32.mrf.mxu0
        %v1171 = vadd.f32 %v1010, %v1170
        %v1172 = vpop.f32.mrf.mxu0
        %1173 = vmatprep.mubr.bf16.mxu0 %v659
        %1174 = vmatmul.mubr.bf16.gmra.mxu0 %v658
        %v1175 = vpop.f32.mrf.mxu0
        %v1176 = vadd.f32 %v1015, %v1175
        %v1177 = vpop.f32.mrf.mxu0
        %v1178 = vpop.f32.mrf.mxu0
        %v1179 = vadd.f32 %v1018, %v1178
        %v1180 = vpop.f32.mrf.mxu0
        %1181 = vmatprep.mubr.bf16.mxu0 %v663
        %1182 = vmatmul.mubr.bf16.gmra.mxu0 %v662
        %v1183 = vpop.f32.mrf.mxu0
        %v1184 = vadd.f32 %v1023, %v1183
        %v1185 = vpop.f32.mrf.mxu0
        %v1186 = vpop.f32.mrf.mxu0
        %v1187 = vadd.f32 %v1026, %v1186
        %v1188 = vpop.f32.mrf.mxu0
        %1189 = vmatprep.mubr.bf16.mxu0 %v667
        %1190 = vmatmul.mubr.bf16.gmra.mxu0 %v666
        %v1191 = vpop.f32.mrf.mxu0
        %v1192 = vadd.f32 %v1031, %v1191
        %v1193 = vpop.f32.mrf.mxu0
        %v1194 = vpop.f32.mrf.mxu0
        %v1195 = vadd.f32 %v1034, %v1194
        %v1196 = vpop.f32.mrf.mxu0
        %1197 = vmatprep.mubr.bf16.mxu0 %v671
        %1198 = vmatmul.mubr.bf16.gmra.mxu0 %v670
        %v1199 = vpop.f32.mrf.mxu0
        %v1200 = vadd.f32 %v1039, %v1199
        %v1201 = vpop.f32.mrf.mxu0
        %v1202 = vpop.f32.mrf.mxu0
        %v1203 = vadd.f32 %v1042, %v1202
        %v1204 = vpop.f32.mrf.mxu0
        %1205 = vmatprep.mubr.bf16.mxu0 %v675
        %1206 = vmatmul.mubr.bf16.gmra.mxu0 %v674
        %v1207 = vpop.f32.mrf.mxu0
        %v1208 = vadd.f32 %v1047, %v1207
        %v1209 = vpop.f32.mrf.mxu0
        %v1210 = vpop.f32.mrf.mxu0
        %v1211 = vadd.f32 %v1050, %v1210
        %v1212 = vpop.f32.mrf.mxu0
        %1213 = vmatprep.mubr.bf16.mxu0 %v679
        %1214 = vmatmul.mubr.bf16.gmra.mxu0 %v678
        %v1215 = vpop.f32.mrf.mxu0
        %v1216 = vadd.f32 %v1055, %v1215
        %v1217 = vpop.f32.mrf.mxu0
        %v1218 = vpop.f32.mrf.mxu0
        %v1219 = vadd.f32 %v1058, %v1218
        %v1220 = vpop.f32.mrf.mxu0
        %1221 = vmatprep.mubr.bf16.mxu0 %v683
        %1222 = vmatmul.mubr.bf16.gmra.mxu0 %v682
        %v1223 = vpop.f32.mrf.mxu0
        %v1224 = vadd.f32 %v1063, %v1223
        %v1225 = vpop.f32.mrf.mxu0
        %v1226 = vpop.f32.mrf.mxu0
        %v1227 = vadd.f32 %v1066, %v1226
        %v1228 = vpop.f32.mrf.mxu0
        %1229 = vmatprep.mubr.bf16.mxu0 %v687
        %1230 = vmatmul.mubr.bf16.gmra.mxu0 %v686
        %v1231 = vpop.f32.mrf.mxu0
        %v1232 = vadd.f32 %v1071, %v1231
        %v1233 = vpop.f32.mrf.mxu0
        %v1234 = vpop.f32.mrf.mxu0
        %v1235 = vadd.f32 %v1074, %v1234
        %v1236 = vpop.f32.mrf.mxu0
        %1237 = vmatprep.mubr.bf16.mxu0 %v691
        %1238 = vmatmul.mubr.bf16.gmra.mxu0 %v690
        %v1239 = vpop.f32.mrf.mxu0
        %v1240 = vadd.f32 %v1079, %v1239
        %v1241 = vpop.f32.mrf.mxu0
        %v1242 = vpop.f32.mrf.mxu0
        %v1243 = vadd.f32 %v1082, %v1242
        %v1244 = vpop.f32.mrf.mxu0
        %1245 = vmatprep.mubr.bf16.mxu0 %v695
        %1246 = vmatmul.mubr.bf16.gmra.mxu0 %v694
        %v1247 = vpop.f32.mrf.mxu0
        %v1248 = vadd.f32 %v1087, %v1247
        %v1249 = vpop.f32.mrf.mxu0
        %v1250 = vpop.f32.mrf.mxu0
        %v1251 = vadd.f32 %v1090, %v1250
        %v1252 = vpop.f32.mrf.mxu0
        %1253 = vmatprep.mubr.bf16.mxu0 %v699
        %1254 = vmatmul.mubr.bf16.gmra.mxu0 %v698
        %v1255 = vpop.f32.mrf.mxu0
        %v1256 = vadd.f32 %v1095, %v1255
        %v1257 = vpop.f32.mrf.mxu0
        %v1258 = vpop.f32.mrf.mxu0
        %v1259 = vadd.f32 %v1098, %v1258
        %v1260 = vpop.f32.mrf.mxu0
        %1261 = vmatprep.mubr.bf16.mxu0 %v703
        %1262 = vmatmul.mubr.bf16.gmra.mxu0 %v702
        %v1263 = vpop.f32.mrf.mxu0
        %v1264 = vadd.f32 %v1103, %v1263
        %v1265 = vpop.f32.mrf.mxu0
        %v1266 = vpop.f32.mrf.mxu0
        %v1267 = vadd.f32 %v1106, %v1266
        %v1268 = vpop.f32.mrf.mxu0
        %1269 = vmatprep.mubr.bf16.mxu0 %v707
        %1270 = vmatmul.mubr.bf16.gmra.mxu0 %v706
        %v1271 = vpop.f32.mrf.mxu0
        %v1272 = vadd.f32 %v1111, %v1271
        %v1273 = vpop.f32.mrf.mxu0
        %v1274 = vpop.f32.mrf.mxu0
        %v1275 = vadd.f32 %v1114, %v1274
        %v1276 = vpop.f32.mrf.mxu0
        %1277 = vmatprep.mubr.bf16.mxu0 %v711
        %1278 = vmatmul.mubr.bf16.gmra.mxu0 %v710
        %v1279 = vpop.f32.mrf.mxu0
        %v1280 = vadd.f32 %v1119, %v1279
        %v1281 = vpop.f32.mrf.mxu0
        %v1282 = vpop.f32.mrf.mxu0
        %v1283 = vadd.f32 %v1122, %v1282
        %v1284 = vpop.f32.mrf.mxu0
        %1285 = vmatprep.mubr.bf16.mxu0 %v715
        %1286 = vmatmul.mubr.bf16.gmra.mxu0 %v714
        %v1287 = vpop.f32.mrf.mxu0
        %v1288 = vadd.f32 %v1127, %v1287
        %v1289 = vpop.f32.mrf.mxu0
        %v1290 = vpop.f32.mrf.mxu0
        %v1291 = vadd.f32 %v1130, %v1290
        %v1292 = vpop.f32.mrf.mxu0
        %1293 = vdwg.mxu0
        %v1294 = vld [vmem:[%s316] sm:$0xff]
        %v1295 = vld [vmem:[%s316 + $0x8] sm:$0xff]
        %v1296 = vld [vmem:[%s316 + $0x10] sm:$0xff]
        %v1297 = vld [vmem:[%s316 + $0x18] sm:$0xff]
        %v1298 = vld [vmem:[%s316 + $0x20] sm:$0xff]
        %v1299 = vld [vmem:[%s316 + $0x28] sm:$0xff]
        %v1300 = vld [vmem:[%s316 + $0x30] sm:$0xff]
        %v1301 = vld [vmem:[%s316 + $0x38] sm:$0xff]
        %v1302 = vld [vmem:[%s316 + $0x40] sm:$0xff]
        %v1303 = vld [vmem:[%s316 + $0x48] sm:$0xff]
        %v1304 = vld [vmem:[%s316 + $0x50] sm:$0xff]
        %v1305 = vld [vmem:[%s316 + $0x58] sm:$0xff]
        %v1306 = vld [vmem:[%s316 + $0x60] sm:$0xff]
        %v1307 = vld [vmem:[%s316 + $0x68] sm:$0xff]
        %v1308 = vld [vmem:[%s316 + $0x70] sm:$0xff]
        %v1309 = vld [vmem:[%s316 + $0x78] sm:$0xff]
        %v1310 = vld [vmem:[%s316 + $0x80] sm:$0xff]
        %v1311 = vld [vmem:[%s316 + $0x88] sm:$0xff]
        %v1312 = vld [vmem:[%s316 + $0x90] sm:$0xff]
        %v1313 = vld [vmem:[%s316 + $0x98] sm:$0xff]
        %v1314 = vld [vmem:[%s316 + $0xa0] sm:$0xff]
        %v1315 = vld [vmem:[%s316 + $0xa8] sm:$0xff]
        %v1316 = vld [vmem:[%s316 + $0xb0] sm:$0xff]
        %v1317 = vld [vmem:[%s316 + $0xb8] sm:$0xff]
        %v1318 = vld [vmem:[%s316 + $0xc0] sm:$0xff]
        %v1319 = vld [vmem:[%s316 + $0xc8] sm:$0xff]
        %v1320 = vld [vmem:[%s316 + $0xd0] sm:$0xff]
        %v1321 = vld [vmem:[%s316 + $0xd8] sm:$0xff]
        %v1322 = vld [vmem:[%s316 + $0xe0] sm:$0xff]
        %v1323 = vld [vmem:[%s316 + $0xe8] sm:$0xff]
        %v1324 = vld [vmem:[%s316 + $0xf0] sm:$0xff]
        %v1325 = vld [vmem:[%s316 + $0xf8] sm:$0xff]
        %1327 = vset.pattern.permute.xlu0 0
        %1328 = vperm.xlu0 %1327, %v1294
        %v1329 = vpop.permute.xlu0 %1328
        %1332 = vset.pattern.permute.xlu0 0
        %1333 = vperm.xlu0 %1332, %v1295
        %v1334 = vpop.permute.xlu0 %1333
        %1337 = vset.pattern.permute.xlu0 0
        %1338 = vperm.xlu0 %1337, %v1296
        %v1339 = vpop.permute.xlu0 %1338
        %1342 = vset.pattern.permute.xlu0 0
        %1343 = vperm.xlu0 %1342, %v1297
        %v1344 = vpop.permute.xlu0 %1343
        %1347 = vset.pattern.permute.xlu0 0
        %1348 = vperm.xlu0 %1347, %v1298
        %v1349 = vpop.permute.xlu0 %1348
        %1352 = vset.pattern.permute.xlu0 0
        %1353 = vperm.xlu0 %1352, %v1299
        %v1354 = vpop.permute.xlu0 %1353
        %1357 = vset.pattern.permute.xlu0 0
        %1358 = vperm.xlu0 %1357, %v1300
        %v1359 = vpop.permute.xlu0 %1358
        %1362 = vset.pattern.permute.xlu0 0
        %1363 = vperm.xlu0 %1362, %v1301
        %v1364 = vpop.permute.xlu0 %1363
        %1367 = vset.pattern.permute.xlu0 0
        %1368 = vperm.xlu0 %1367, %v1302
        %v1369 = vpop.permute.xlu0 %1368
        %1372 = vset.pattern.permute.xlu0 0
        %1373 = vperm.xlu0 %1372, %v1303
        %v1374 = vpop.permute.xlu0 %1373
        %1377 = vset.pattern.permute.xlu0 0
        %1378 = vperm.xlu0 %1377, %v1304
        %v1379 = vpop.permute.xlu0 %1378
        %1382 = vset.pattern.permute.xlu0 0
        %1383 = vperm.xlu0 %1382, %v1305
        %v1384 = vpop.permute.xlu0 %1383
        %1387 = vset.pattern.permute.xlu0 0
        %1388 = vperm.xlu0 %1387, %v1306
        %v1389 = vpop.permute.xlu0 %1388
        %1392 = vset.pattern.permute.xlu0 0
        %1393 = vperm.xlu0 %1392, %v1307
        %v1394 = vpop.permute.xlu0 %1393
        %1397 = vset.pattern.permute.xlu0 0
        %1398 = vperm.xlu0 %1397, %v1308
        %v1399 = vpop.permute.xlu0 %1398
        %1402 = vset.pattern.permute.xlu0 0
        %1403 = vperm.xlu0 %1402, %v1309
        %v1404 = vpop.permute.xlu0 %1403
        %1407 = vset.pattern.permute.xlu0 0
        %1408 = vperm.xlu0 %1407, %v1310
        %v1409 = vpop.permute.xlu0 %1408
        %1412 = vset.pattern.permute.xlu0 0
        %1413 = vperm.xlu0 %1412, %v1311
        %v1414 = vpop.permute.xlu0 %1413
        %1417 = vset.pattern.permute.xlu0 0
        %1418 = vperm.xlu0 %1417, %v1312
        %v1419 = vpop.permute.xlu0 %1418
        %1422 = vset.pattern.permute.xlu0 0
        %1423 = vperm.xlu0 %1422, %v1313
        %v1424 = vpop.permute.xlu0 %1423
        %1427 = vset.pattern.permute.xlu0 0
        %1428 = vperm.xlu0 %1427, %v1314
        %v1429 = vpop.permute.xlu0 %1428
        %1432 = vset.pattern.permute.xlu0 0
        %1433 = vperm.xlu0 %1432, %v1315
        %v1434 = vpop.permute.xlu0 %1433
        %1437 = vset.pattern.permute.xlu0 0
        %1438 = vperm.xlu0 %1437, %v1316
        %v1439 = vpop.permute.xlu0 %1438
        %1442 = vset.pattern.permute.xlu0 0
        %1443 = vperm.xlu0 %1442, %v1317
        %v1444 = vpop.permute.xlu0 %1443
        %1447 = vset.pattern.permute.xlu0 0
        %1448 = vperm.xlu0 %1447, %v1318
        %v1449 = vpop.permute.xlu0 %1448
        %1452 = vset.pattern.permute.xlu0 0
        %1453 = vperm.xlu0 %1452, %v1319
        %v1454 = vpop.permute.xlu0 %1453
        %1457 = vset.pattern.permute.xlu0 0
        %1458 = vperm.xlu0 %1457, %v1320
        %v1459 = vpop.permute.xlu0 %1458
        %1462 = vset.pattern.permute.xlu0 0
        %1463 = vperm.xlu0 %1462, %v1321
        %v1464 = vpop.permute.xlu0 %1463
        %1467 = vset.pattern.permute.xlu0 0
        %1468 = vperm.xlu0 %1467, %v1322
        %v1469 = vpop.permute.xlu0 %1468
        %1472 = vset.pattern.permute.xlu0 0
        %1473 = vperm.xlu0 %1472, %v1323
        %v1474 = vpop.permute.xlu0 %1473
        %1477 = vset.pattern.permute.xlu0 0
        %1478 = vperm.xlu0 %1477, %v1324
        %v1479 = vpop.permute.xlu0 %1478
        %1482 = vset.pattern.permute.xlu0 0
        %1483 = vperm.xlu0 %1482, %v1325
        %v1484 = vpop.permute.xlu0 %1483
        %v1486 = vmul.f32 %v1329, %v1168
        %v1487 = vmul.f32 %v1334, %v1171
        %v1488 = vmul.f32 %v1339, %v1176
        %v1489 = vmul.f32 %v1344, %v1179
        %v1490 = vmul.f32 %v1349, %v1184
        %v1491 = vmul.f32 %v1354, %v1187
        %v1492 = vmul.f32 %v1359, %v1192
        %v1493 = vmul.f32 %v1364, %v1195
        %v1494 = vmul.f32 %v1369, %v1200
        %v1495 = vmul.f32 %v1374, %v1203
        %v1496 = vmul.f32 %v1379, %v1208
        %v1497 = vmul.f32 %v1384, %v1211
        %v1498 = vmul.f32 %v1389, %v1216
        %v1499 = vmul.f32 %v1394, %v1219
        %v1500 = vmul.f32 %v1399, %v1224
        %v1501 = vmul.f32 %v1404, %v1227
        %v1502 = vmul.f32 %v1409, %v1232
        %v1503 = vmul.f32 %v1414, %v1235
        %v1504 = vmul.f32 %v1419, %v1240
        %v1505 = vmul.f32 %v1424, %v1243
        %v1506 = vmul.f32 %v1429, %v1248
        %v1507 = vmul.f32 %v1434, %v1251
        %v1508 = vmul.f32 %v1439, %v1256
        %v1509 = vmul.f32 %v1444, %v1259
        %v1510 = vmul.f32 %v1449, %v1264
        %v1511 = vmul.f32 %v1454, %v1267
        %v1512 = vmul.f32 %v1459, %v1272
        %v1513 = vmul.f32 %v1464, %v1275
        %v1514 = vmul.f32 %v1469, %v1280
        %v1515 = vmul.f32 %v1474, %v1283
        %v1516 = vmul.f32 %v1479, %v1288
        %v1517 = vmul.f32 %v1484, %v1291
        %v1518 = vld [vmem:[%s262] sm:$0xff]
        %v1519 = vld [vmem:[%s262 + $0x8] sm:$0xff]
        %v1520 = vld [vmem:[%s262 + $0x10] sm:$0xff]
        %v1521 = vld [vmem:[%s262 + $0x18] sm:$0xff]
        %v1522 = vld [vmem:[%s262 + $0x20] sm:$0xff]
        %v1523 = vld [vmem:[%s262 + $0x28] sm:$0xff]
        %v1524 = vld [vmem:[%s262 + $0x30] sm:$0xff]
        %v1525 = vld [vmem:[%s262 + $0x38] sm:$0xff]
        %v1526 = vld [vmem:[%s262 + $0x40] sm:$0xff]
        %v1527 = vld [vmem:[%s262 + $0x48] sm:$0xff]
        %v1528 = vld [vmem:[%s262 + $0x50] sm:$0xff]
        %v1529 = vld [vmem:[%s262 + $0x58] sm:$0xff]
        %v1530 = vld [vmem:[%s262 + $0x60] sm:$0xff]
        %v1531 = vld [vmem:[%s262 + $0x68] sm:$0xff]
        %v1532 = vld [vmem:[%s262 + $0x70] sm:$0xff]
        %v1533 = vld [vmem:[%s262 + $0x78] sm:$0xff]
        %v1534 = vld [vmem:[%s262 + $0x80] sm:$0xff]
        %v1535 = vld [vmem:[%s262 + $0x88] sm:$0xff]
        %v1536 = vld [vmem:[%s262 + $0x90] sm:$0xff]
        %v1537 = vld [vmem:[%s262 + $0x98] sm:$0xff]
        %v1538 = vld [vmem:[%s262 + $0xa0] sm:$0xff]
        %v1539 = vld [vmem:[%s262 + $0xa8] sm:$0xff]
        %v1540 = vld [vmem:[%s262 + $0xb0] sm:$0xff]
        %v1541 = vld [vmem:[%s262 + $0xb8] sm:$0xff]
        %v1542 = vld [vmem:[%s262 + $0xc0] sm:$0xff]
        %v1543 = vld [vmem:[%s262 + $0xc8] sm:$0xff]
        %v1544 = vld [vmem:[%s262 + $0xd0] sm:$0xff]
        %v1545 = vld [vmem:[%s262 + $0xd8] sm:$0xff]
        %v1546 = vld [vmem:[%s262 + $0xe0] sm:$0xff]
        %v1547 = vld [vmem:[%s262 + $0xe8] sm:$0xff]
        %v1548 = vld [vmem:[%s262 + $0xf0] sm:$0xff]
        %v1549 = vld [vmem:[%s262 + $0xf8] sm:$0xff]
        %v1550 = vadd.f32 %v1486, %v1518
        %v1551 = vadd.f32 %v1487, %v1519
        %v1552 = vadd.f32 %v1488, %v1520
        %v1553 = vadd.f32 %v1489, %v1521
        %v1554 = vadd.f32 %v1490, %v1522
        %v1555 = vadd.f32 %v1491, %v1523
        %v1556 = vadd.f32 %v1492, %v1524
        %v1557 = vadd.f32 %v1493, %v1525
        %v1558 = vadd.f32 %v1494, %v1526
        %v1559 = vadd.f32 %v1495, %v1527
        %v1560 = vadd.f32 %v1496, %v1528
        %v1561 = vadd.f32 %v1497, %v1529
        %v1562 = vadd.f32 %v1498, %v1530
        %v1563 = vadd.f32 %v1499, %v1531
        %v1564 = vadd.f32 %v1500, %v1532
        %v1565 = vadd.f32 %v1501, %v1533
        %v1566 = vadd.f32 %v1502, %v1534
        %v1567 = vadd.f32 %v1503, %v1535
        %v1568 = vadd.f32 %v1504, %v1536
        %v1569 = vadd.f32 %v1505, %v1537
        %v1570 = vadd.f32 %v1506, %v1538
        %v1571 = vadd.f32 %v1507, %v1539
        %v1572 = vadd.f32 %v1508, %v1540
        %v1573 = vadd.f32 %v1509, %v1541
        %v1574 = vadd.f32 %v1510, %v1542
        %v1575 = vadd.f32 %v1511, %v1543
        %v1576 = vadd.f32 %v1512, %v1544
        %v1577 = vadd.f32 %v1513, %v1545
        %v1578 = vadd.f32 %v1514, %v1546
        %v1579 = vadd.f32 %v1515, %v1547
        %v1580 = vadd.f32 %v1516, %v1548
        %v1581 = vadd.f32 %v1517, %v1549
        %v1582 = vxor.u32 %v1550, 2147483648
        %v1583 = vxor.u32 %v1551, 2147483648
        %v1584 = vxor.u32 %v1552, 2147483648
        %v1585 = vxor.u32 %v1553, 2147483648
        %v1586 = vxor.u32 %v1554, 2147483648
        %v1587 = vxor.u32 %v1555, 2147483648
        %v1588 = vxor.u32 %v1556, 2147483648
        %v1589 = vxor.u32 %v1557, 2147483648
        %v1590 = vxor.u32 %v1558, 2147483648
        %v1591 = vxor.u32 %v1559, 2147483648
        %v1592 = vxor.u32 %v1560, 2147483648
        %v1593 = vxor.u32 %v1561, 2147483648
        %v1594 = vxor.u32 %v1562, 2147483648
        %v1595 = vxor.u32 %v1563, 2147483648
        %v1596 = vxor.u32 %v1564, 2147483648
        %v1597 = vxor.u32 %v1565, 2147483648
        %v1598 = vxor.u32 %v1566, 2147483648
        %v1599 = vxor.u32 %v1567, 2147483648
        %v1600 = vxor.u32 %v1568, 2147483648
        %v1601 = vxor.u32 %v1569, 2147483648
        %v1602 = vxor.u32 %v1570, 2147483648
        %v1603 = vxor.u32 %v1571, 2147483648
        %v1604 = vxor.u32 %v1572, 2147483648
        %v1605 = vxor.u32 %v1573, 2147483648
        %v1606 = vxor.u32 %v1574, 2147483648
        %v1607 = vxor.u32 %v1575, 2147483648
        %v1608 = vxor.u32 %v1576, 2147483648
        %v1609 = vxor.u32 %v1577, 2147483648
        %v1610 = vxor.u32 %v1578, 2147483648
        %v1611 = vxor.u32 %v1579, 2147483648
        %v1612 = vxor.u32 %v1580, 2147483648
        %v1613 = vxor.u32 %v1581, 2147483648
        %v1614 = vmul.f32 %v1582, 1.442695
        %v1615 = vpow.pop %v1614
        %v1616 = vmul.f32 %v1583, 1.442695
        %v1617 = vpow.pop %v1616
        %v1618 = vmul.f32 %v1584, 1.442695
        %v1619 = vpow.pop %v1618
        %v1620 = vmul.f32 %v1585, 1.442695
        %v1621 = vpow.pop %v1620
        %v1622 = vmul.f32 %v1586, 1.442695
        %v1623 = vpow.pop %v1622
        %v1624 = vmul.f32 %v1587, 1.442695
        %v1625 = vpow.pop %v1624
        %v1626 = vmul.f32 %v1588, 1.442695
        %v1627 = vpow.pop %v1626
        %v1628 = vmul.f32 %v1589, 1.442695
        %v1629 = vpow.pop %v1628
        %v1630 = vmul.f32 %v1590, 1.442695
        %v1631 = vpow.pop %v1630
        %v1632 = vmul.f32 %v1591, 1.442695
        %v1633 = vpow.pop %v1632
        %v1634 = vmul.f32 %v1592, 1.442695
        %v1635 = vpow.pop %v1634
        %v1636 = vmul.f32 %v1593, 1.442695
        %v1637 = vpow.pop %v1636
        %v1638 = vmul.f32 %v1594, 1.442695
        %v1639 = vpow.pop %v1638
        %v1640 = vmul.f32 %v1595, 1.442695
        %v1641 = vpow.pop %v1640
        %v1642 = vmul.f32 %v1596, 1.442695
        %v1643 = vpow.pop %v1642
        %v1644 = vmul.f32 %v1597, 1.442695
        %v1645 = vpow.pop %v1644
        %v1646 = vmul.f32 %v1598, 1.442695
        %v1647 = vpow.pop %v1646
        %v1648 = vmul.f32 %v1599, 1.442695
        %v1649 = vpow.pop %v1648
        %v1650 = vmul.f32 %v1600, 1.442695
        %v1651 = vpow.pop %v1650
        %v1652 = vmul.f32 %v1601, 1.442695
        %v1653 = vpow.pop %v1652
        %v1654 = vmul.f32 %v1602, 1.442695
        %v1655 = vpow.pop %v1654
        %v1656 = vmul.f32 %v1603, 1.442695
        %v1657 = vpow.pop %v1656
        %v1658 = vmul.f32 %v1604, 1.442695
        %v1659 = vpow.pop %v1658
        %v1660 = vmul.f32 %v1605, 1.442695
        %v1661 = vpow.pop %v1660
        %v1662 = vmul.f32 %v1606, 1.442695
        %v1663 = vpow.pop %v1662
        %v1664 = vmul.f32 %v1607, 1.442695
        %v1665 = vpow.pop %v1664
        %v1666 = vmul.f32 %v1608, 1.442695
        %v1667 = vpow.pop %v1666
        %v1668 = vmul.f32 %v1609, 1.442695
        %v1669 = vpow.pop %v1668
        %v1670 = vmul.f32 %v1610, 1.442695
        %v1671 = vpow.pop %v1670
        %v1672 = vmul.f32 %v1611, 1.442695
        %v1673 = vpow.pop %v1672
        %v1674 = vmul.f32 %v1612, 1.442695
        %v1675 = vpow.pop %v1674
        %v1676 = vmul.f32 %v1613, 1.442695
        %v1677 = vpow.pop %v1676
        %v1678 = vadd.f32 %v1615, 1.0
        %v1679 = vadd.f32 %v1617, 1.0
        %v1680 = vadd.f32 %v1619, 1.0
        %v1681 = vadd.f32 %v1621, 1.0
        %v1682 = vadd.f32 %v1623, 1.0
        %v1683 = vadd.f32 %v1625, 1.0
        %v1684 = vadd.f32 %v1627, 1.0
        %v1685 = vadd.f32 %v1629, 1.0
        %v1686 = vadd.f32 %v1631, 1.0
        %v1687 = vadd.f32 %v1633, 1.0
        %v1688 = vadd.f32 %v1635, 1.0
        %v1689 = vadd.f32 %v1637, 1.0
        %v1690 = vadd.f32 %v1639, 1.0
        %v1691 = vadd.f32 %v1641, 1.0
        %v1692 = vadd.f32 %v1643, 1.0
        %v1693 = vadd.f32 %v1645, 1.0
        %v1694 = vadd.f32 %v1647, 1.0
        %v1695 = vadd.f32 %v1649, 1.0
        %v1696 = vadd.f32 %v1651, 1.0
        %v1697 = vadd.f32 %v1653, 1.0
        %v1698 = vadd.f32 %v1655, 1.0
        %v1699 = vadd.f32 %v1657, 1.0
        %v1700 = vadd.f32 %v1659, 1.0
        %v1701 = vadd.f32 %v1661, 1.0
        %v1702 = vadd.f32 %v1663, 1.0
        %v1703 = vadd.f32 %v1665, 1.0
        %v1704 = vadd.f32 %v1667, 1.0
        %v1705 = vadd.f32 %v1669, 1.0
        %v1706 = vadd.f32 %v1671, 1.0
        %v1707 = vadd.f32 %v1673, 1.0
        %v1708 = vadd.f32 %v1675, 1.0
        %v1709 = vadd.f32 %v1677, 1.0
        %v1710 = vrcp.pop %v1678
        %v1711 = vmul.f32 1.0, %v1710
        %v1712 = vrcp.pop %v1679
        %v1713 = vmul.f32 1.0, %v1712
        %v1714 = vrcp.pop %v1680
        %v1715 = vmul.f32 1.0, %v1714
        %v1716 = vrcp.pop %v1681
        %v1717 = vmul.f32 1.0, %v1716
        %v1718 = vrcp.pop %v1682
        %v1719 = vmul.f32 1.0, %v1718
        %v1720 = vrcp.pop %v1683
        %v1721 = vmul.f32 1.0, %v1720
        %v1722 = vrcp.pop %v1684
        %v1723 = vmul.f32 1.0, %v1722
        %v1724 = vrcp.pop %v1685
        %v1725 = vmul.f32 1.0, %v1724
        %v1726 = vrcp.pop %v1686
        %v1727 = vmul.f32 1.0, %v1726
        %v1728 = vrcp.pop %v1687
        %v1729 = vmul.f32 1.0, %v1728
        %v1730 = vrcp.pop %v1688
        %v1731 = vmul.f32 1.0, %v1730
        %v1732 = vrcp.pop %v1689
        %v1733 = vmul.f32 1.0, %v1732
        %v1734 = vrcp.pop %v1690
        %v1735 = vmul.f32 1.0, %v1734
        %v1736 = vrcp.pop %v1691
        %v1737 = vmul.f32 1.0, %v1736
        %v1738 = vrcp.pop %v1692
        %v1739 = vmul.f32 1.0, %v1738
        %v1740 = vrcp.pop %v1693
        %v1741 = vmul.f32 1.0, %v1740
        %v1742 = vrcp.pop %v1694
        %v1743 = vmul.f32 1.0, %v1742
        %v1744 = vrcp.pop %v1695
        %v1745 = vmul.f32 1.0, %v1744
        %v1746 = vrcp.pop %v1696
        %v1747 = vmul.f32 1.0, %v1746
        %v1748 = vrcp.pop %v1697
        %v1749 = vmul.f32 1.0, %v1748
        %v1750 = vrcp.pop %v1698
        %v1751 = vmul.f32 1.0, %v1750
        %v1752 = vrcp.pop %v1699
        %v1753 = vmul.f32 1.0, %v1752
        %v1754 = vrcp.pop %v1700
        %v1755 = vmul.f32 1.0, %v1754
        %v1756 = vrcp.pop %v1701
        %v1757 = vmul.f32 1.0, %v1756
        %v1758 = vrcp.pop %v1702
        %v1759 = vmul.f32 1.0, %v1758
        %v1760 = vrcp.pop %v1703
        %v1761 = vmul.f32 1.0, %v1760
        %v1762 = vrcp.pop %v1704
        %v1763 = vmul.f32 1.0, %v1762
        %v1764 = vrcp.pop %v1705
        %v1765 = vmul.f32 1.0, %v1764
        %v1766 = vrcp.pop %v1706
        %v1767 = vmul.f32 1.0, %v1766
        %v1768 = vrcp.pop %v1707
        %v1769 = vmul.f32 1.0, %v1768
        %v1770 = vrcp.pop %v1708
        %v1771 = vmul.f32 1.0, %v1770
        %v1772 = vrcp.pop %v1709
        %v1773 = vmul.f32 1.0, %v1772
        %v1774 = vtanh.pop %v1550
        %v1775 = vtanh.pop %v1551
        %v1776 = vtanh.pop %v1552
        %v1777 = vtanh.pop %v1553
        %v1778 = vtanh.pop %v1554
        %v1779 = vtanh.pop %v1555
        %v1780 = vtanh.pop %v1556
        %v1781 = vtanh.pop %v1557
        %v1782 = vtanh.pop %v1558
        %v1783 = vtanh.pop %v1559
        %v1784 = vtanh.pop %v1560
        %v1785 = vtanh.pop %v1561
        %v1786 = vtanh.pop %v1562
        %v1787 = vtanh.pop %v1563
        %v1788 = vtanh.pop %v1564
        %v1789 = vtanh.pop %v1565
        %v1790 = vtanh.pop %v1566
        %v1791 = vtanh.pop %v1567
        %v1792 = vtanh.pop %v1568
        %v1793 = vtanh.pop %v1569
        %v1794 = vtanh.pop %v1570
        %v1795 = vtanh.pop %v1571
        %v1796 = vtanh.pop %v1572
        %v1797 = vtanh.pop %v1573
        %v1798 = vtanh.pop %v1574
        %v1799 = vtanh.pop %v1575
        %v1800 = vtanh.pop %v1576
        %v1801 = vtanh.pop %v1577
        %v1802 = vtanh.pop %v1578
        %v1803 = vtanh.pop %v1579
        %v1804 = vtanh.pop %v1580
        %v1805 = vtanh.pop %v1581
        %v1806 = vld [vmem:[%s323] sm:$0xff]
        %v1807 = vld [vmem:[%s323 + $0x8] sm:$0xff]
        %v1808 = vld [vmem:[%s323 + $0x10] sm:$0xff]
        %v1809 = vld [vmem:[%s323 + $0x18] sm:$0xff]
        %v1810 = vld [vmem:[%s323 + $0x20] sm:$0xff]
        %v1811 = vld [vmem:[%s323 + $0x28] sm:$0xff]
        %v1812 = vld [vmem:[%s323 + $0x30] sm:$0xff]
        %v1813 = vld [vmem:[%s323 + $0x38] sm:$0xff]
        %v1814 = vld [vmem:[%s323 + $0x40] sm:$0xff]
        %v1815 = vld [vmem:[%s323 + $0x48] sm:$0xff]
        %v1816 = vld [vmem:[%s323 + $0x50] sm:$0xff]
        %v1817 = vld [vmem:[%s323 + $0x58] sm:$0xff]
        %v1818 = vld [vmem:[%s323 + $0x60] sm:$0xff]
        %v1819 = vld [vmem:[%s323 + $0x68] sm:$0xff]
        %v1820 = vld [vmem:[%s323 + $0x70] sm:$0xff]
        %v1821 = vld [vmem:[%s323 + $0x78] sm:$0xff]
        %v1822 = vld [vmem:[%s323 + $0x80] sm:$0xff]
        %v1823 = vld [vmem:[%s323 + $0x88] sm:$0xff]
        %v1824 = vld [vmem:[%s323 + $0x90] sm:$0xff]
        %v1825 = vld [vmem:[%s323 + $0x98] sm:$0xff]
        %v1826 = vld [vmem:[%s323 + $0xa0] sm:$0xff]
        %v1827 = vld [vmem:[%s323 + $0xa8] sm:$0xff]
        %v1828 = vld [vmem:[%s323 + $0xb0] sm:$0xff]
        %v1829 = vld [vmem:[%s323 + $0xb8] sm:$0xff]
        %v1830 = vld [vmem:[%s323 + $0xc0] sm:$0xff]
        %v1831 = vld [vmem:[%s323 + $0xc8] sm:$0xff]
        %v1832 = vld [vmem:[%s323 + $0xd0] sm:$0xff]
        %v1833 = vld [vmem:[%s323 + $0xd8] sm:$0xff]
        %v1834 = vld [vmem:[%s323 + $0xe0] sm:$0xff]
        %v1835 = vld [vmem:[%s323 + $0xe8] sm:$0xff]
        %v1836 = vld [vmem:[%s323 + $0xf0] sm:$0xff]
        %v1837 = vld [vmem:[%s323 + $0xf8] sm:$0xff]
        %1870 = vrot.lane.b32.xlu0 %v1806, 32
        %v1871 = vpop.permute.xlu0 %1870
        %1872 = vrot.lane.b32.xlu0 %v1807, 32
        %v1873 = vpop.permute.xlu0 %1872
        %1874 = vrot.lane.b32.xlu0 %v1808, 32
        %v1875 = vpop.permute.xlu0 %1874
        %1876 = vrot.lane.b32.xlu0 %v1809, 32
        %v1877 = vpop.permute.xlu0 %1876
        %1878 = vrot.lane.b32.xlu0 %v1810, 32
        %v1879 = vpop.permute.xlu0 %1878
        %1880 = vrot.lane.b32.xlu0 %v1811, 32
        %v1881 = vpop.permute.xlu0 %1880
        %1882 = vrot.lane.b32.xlu0 %v1812, 32
        %v1883 = vpop.permute.xlu0 %1882
        %1884 = vrot.lane.b32.xlu0 %v1813, 32
        %v1885 = vpop.permute.xlu0 %1884
        %1886 = vrot.lane.b32.xlu0 %v1814, 32
        %v1887 = vpop.permute.xlu0 %1886
        %1888 = vrot.lane.b32.xlu0 %v1815, 32
        %v1889 = vpop.permute.xlu0 %1888
        %1890 = vrot.lane.b32.xlu0 %v1816, 32
        %v1891 = vpop.permute.xlu0 %1890
        %1892 = vrot.lane.b32.xlu0 %v1817, 32
        %v1893 = vpop.permute.xlu0 %1892
        %1894 = vrot.lane.b32.xlu0 %v1818, 32
        %v1895 = vpop.permute.xlu0 %1894
        %1896 = vrot.lane.b32.xlu0 %v1819, 32
        %v1897 = vpop.permute.xlu0 %1896
        %1898 = vrot.lane.b32.xlu0 %v1820, 32
        %v1899 = vpop.permute.xlu0 %1898
        %1900 = vrot.lane.b32.xlu0 %v1821, 32
        %v1901 = vpop.permute.xlu0 %1900
        %1902 = vrot.lane.b32.xlu0 %v1822, 32
        %v1903 = vpop.permute.xlu0 %1902
        %1904 = vrot.lane.b32.xlu0 %v1823, 32
        %v1905 = vpop.permute.xlu0 %1904
        %1906 = vrot.lane.b32.xlu0 %v1824, 32
        %v1907 = vpop.permute.xlu0 %1906
        %1908 = vrot.lane.b32.xlu0 %v1825, 32
        %v1909 = vpop.permute.xlu0 %1908
        %1910 = vrot.lane.b32.xlu0 %v1826, 32
        %v1911 = vpop.permute.xlu0 %1910
        %1912 = vrot.lane.b32.xlu0 %v1827, 32
        %v1913 = vpop.permute.xlu0 %1912
        %1914 = vrot.lane.b32.xlu0 %v1828, 32
        %v1915 = vpop.permute.xlu0 %1914
        %1916 = vrot.lane.b32.xlu0 %v1829, 32
        %v1917 = vpop.permute.xlu0 %1916
        %1918 = vrot.lane.b32.xlu0 %v1830, 32
        %v1919 = vpop.permute.xlu0 %1918
        %1920 = vrot.lane.b32.xlu0 %v1831, 32
        %v1921 = vpop.permute.xlu0 %1920
        %1922 = vrot.lane.b32.xlu0 %v1832, 32
        %v1923 = vpop.permute.xlu0 %1922
        %1924 = vrot.lane.b32.xlu0 %v1833, 32
        %v1925 = vpop.permute.xlu0 %1924
        %1926 = vrot.lane.b32.xlu0 %v1834, 32
        %v1927 = vpop.permute.xlu0 %1926
        %1928 = vrot.lane.b32.xlu0 %v1835, 32
        %v1929 = vpop.permute.xlu0 %1928
        %1930 = vrot.lane.b32.xlu0 %v1836, 32
        %v1931 = vpop.permute.xlu0 %1930
        %1932 = vrot.lane.b32.xlu0 %v1837, 32
        %v1933 = vpop.permute.xlu0 %1932
        %v1966 = vmul.f32 %v1711, %v1871
        %v1967 = vmul.f32 %v1713, %v1873
        %v1968 = vmul.f32 %v1715, %v1875
        %v1969 = vmul.f32 %v1717, %v1877
        %v1970 = vmul.f32 %v1719, %v1879
        %v1971 = vmul.f32 %v1721, %v1881
        %v1972 = vmul.f32 %v1723, %v1883
        %v1973 = vmul.f32 %v1725, %v1885
        %v1974 = vmul.f32 %v1727, %v1887
        %v1975 = vmul.f32 %v1729, %v1889
        %v1976 = vmul.f32 %v1731, %v1891
        %v1977 = vmul.f32 %v1733, %v1893
        %v1978 = vmul.f32 %v1735, %v1895
        %v1979 = vmul.f32 %v1737, %v1897
        %v1980 = vmul.f32 %v1739, %v1899
        %v1981 = vmul.f32 %v1741, %v1901
        %v1982 = vmul.f32 %v1743, %v1903
        %v1983 = vmul.f32 %v1745, %v1905
        %v1984 = vmul.f32 %v1747, %v1907
        %v1985 = vmul.f32 %v1749, %v1909
        %v1986 = vmul.f32 %v1751, %v1911
        %v1987 = vmul.f32 %v1753, %v1913
        %v1988 = vmul.f32 %v1755, %v1915
        %v1989 = vmul.f32 %v1757, %v1917
        %v1990 = vmul.f32 %v1759, %v1919
        %v1991 = vmul.f32 %v1761, %v1921
        %v1992 = vmul.f32 %v1763, %v1923
        %v1993 = vmul.f32 %v1765, %v1925
        %v1994 = vmul.f32 %v1767, %v1927
        %v1995 = vmul.f32 %v1769, %v1929
        %v1996 = vmul.f32 %v1771, %v1931
        %v1997 = vmul.f32 %v1773, %v1933
        %2030 = vrot.lane.b32.xlu0 %v1774, 64
        %v2031 = vpop.permute.xlu0 %2030
        %2032 = vrot.lane.b32.xlu0 %v1775, 64
        %v2033 = vpop.permute.xlu0 %2032
        %2034 = vrot.lane.b32.xlu0 %v1776, 64
        %v2035 = vpop.permute.xlu0 %2034
        %2036 = vrot.lane.b32.xlu0 %v1777, 64
        %v2037 = vpop.permute.xlu0 %2036
        %2038 = vrot.lane.b32.xlu0 %v1778, 64
        %v2039 = vpop.permute.xlu0 %2038
        %2040 = vrot.lane.b32.xlu0 %v1779, 64
        %v2041 = vpop.permute.xlu0 %2040
        %2042 = vrot.lane.b32.xlu0 %v1780, 64
        %v2043 = vpop.permute.xlu0 %2042
        %2044 = vrot.lane.b32.xlu0 %v1781, 64
        %v2045 = vpop.permute.xlu0 %2044
        %2046 = vrot.lane.b32.xlu0 %v1782, 64
        %v2047 = vpop.permute.xlu0 %2046
        %2048 = vrot.lane.b32.xlu0 %v1783, 64
        %v2049 = vpop.permute.xlu0 %2048
        %2050 = vrot.lane.b32.xlu0 %v1784, 64
        %v2051 = vpop.permute.xlu0 %2050
        %2052 = vrot.lane.b32.xlu0 %v1785, 64
        %v2053 = vpop.permute.xlu0 %2052
        %2054 = vrot.lane.b32.xlu0 %v1786, 64
        %v2055 = vpop.permute.xlu0 %2054
        %2056 = vrot.lane.b32.xlu0 %v1787, 64
        %v2057 = vpop.permute.xlu0 %2056
        %2058 = vrot.lane.b32.xlu0 %v1788, 64
        %v2059 = vpop.permute.xlu0 %2058
        %2060 = vrot.lane.b32.xlu0 %v1789, 64
        %v2061 = vpop.permute.xlu0 %2060
        %2062 = vrot.lane.b32.xlu0 %v1790, 64
        %v2063 = vpop.permute.xlu0 %2062
        %2064 = vrot.lane.b32.xlu0 %v1791, 64
        %v2065 = vpop.permute.xlu0 %2064
        %2066 = vrot.lane.b32.xlu0 %v1792, 64
        %v2067 = vpop.permute.xlu0 %2066
        %2068 = vrot.lane.b32.xlu0 %v1793, 64
        %v2069 = vpop.permute.xlu0 %2068
        %2070 = vrot.lane.b32.xlu0 %v1794, 64
        %v2071 = vpop.permute.xlu0 %2070
        %2072 = vrot.lane.b32.xlu0 %v1795, 64
        %v2073 = vpop.permute.xlu0 %2072
        %2074 = vrot.lane.b32.xlu0 %v1796, 64
        %v2075 = vpop.permute.xlu0 %2074
        %2076 = vrot.lane.b32.xlu0 %v1797, 64
        %v2077 = vpop.permute.xlu0 %2076
        %2078 = vrot.lane.b32.xlu0 %v1798, 64
        %v2079 = vpop.permute.xlu0 %2078
        %2080 = vrot.lane.b32.xlu0 %v1799, 64
        %v2081 = vpop.permute.xlu0 %2080
        %2082 = vrot.lane.b32.xlu0 %v1800, 64
        %v2083 = vpop.permute.xlu0 %2082
        %2084 = vrot.lane.b32.xlu0 %v1801, 64
        %v2085 = vpop.permute.xlu0 %2084
        %2086 = vrot.lane.b32.xlu0 %v1802, 64
        %v2087 = vpop.permute.xlu0 %2086
        %2088 = vrot.lane.b32.xlu0 %v1803, 64
        %v2089 = vpop.permute.xlu0 %2088
        %2090 = vrot.lane.b32.xlu0 %v1804, 64
        %v2091 = vpop.permute.xlu0 %2090
        %2092 = vrot.lane.b32.xlu0 %v1805, 64
        %v2093 = vpop.permute.xlu0 %2092
        %v2126 = vmul.f32 %v1711, %v2031
        %v2127 = vmul.f32 %v1713, %v2033
        %v2128 = vmul.f32 %v1715, %v2035
        %v2129 = vmul.f32 %v1717, %v2037
        %v2130 = vmul.f32 %v1719, %v2039
        %v2131 = vmul.f32 %v1721, %v2041
        %v2132 = vmul.f32 %v1723, %v2043
        %v2133 = vmul.f32 %v1725, %v2045
        %v2134 = vmul.f32 %v1727, %v2047
        %v2135 = vmul.f32 %v1729, %v2049
        %v2136 = vmul.f32 %v1731, %v2051
        %v2137 = vmul.f32 %v1733, %v2053
        %v2138 = vmul.f32 %v1735, %v2055
        %v2139 = vmul.f32 %v1737, %v2057
        %v2140 = vmul.f32 %v1739, %v2059
        %v2141 = vmul.f32 %v1741, %v2061
        %v2142 = vmul.f32 %v1743, %v2063
        %v2143 = vmul.f32 %v1745, %v2065
        %v2144 = vmul.f32 %v1747, %v2067
        %v2145 = vmul.f32 %v1749, %v2069
        %v2146 = vmul.f32 %v1751, %v2071
        %v2147 = vmul.f32 %v1753, %v2073
        %v2148 = vmul.f32 %v1755, %v2075
        %v2149 = vmul.f32 %v1757, %v2077
        %v2150 = vmul.f32 %v1759, %v2079
        %v2151 = vmul.f32 %v1761, %v2081
        %v2152 = vmul.f32 %v1763, %v2083
        %v2153 = vmul.f32 %v1765, %v2085
        %v2154 = vmul.f32 %v1767, %v2087
        %v2155 = vmul.f32 %v1769, %v2089
        %v2156 = vmul.f32 %v1771, %v2091
        %v2157 = vmul.f32 %v1773, %v2093
        %2190 = vrot.lane.b32.xlu0 %v2126, 32
        %v2191 = vpop.permute.xlu0 %2190
        %2192 = vrot.lane.b32.xlu0 %v2127, 32
        %v2193 = vpop.permute.xlu0 %2192
        %2194 = vrot.lane.b32.xlu0 %v2128, 32
        %v2195 = vpop.permute.xlu0 %2194
        %2196 = vrot.lane.b32.xlu0 %v2129, 32
        %v2197 = vpop.permute.xlu0 %2196
        %2198 = vrot.lane.b32.xlu0 %v2130, 32
        %v2199 = vpop.permute.xlu0 %2198
        %2200 = vrot.lane.b32.xlu0 %v2131, 32
        %v2201 = vpop.permute.xlu0 %2200
        %2202 = vrot.lane.b32.xlu0 %v2132, 32
        %v2203 = vpop.permute.xlu0 %2202
        %2204 = vrot.lane.b32.xlu0 %v2133, 32
        %v2205 = vpop.permute.xlu0 %2204
        %2206 = vrot.lane.b32.xlu0 %v2134, 32
        %v2207 = vpop.permute.xlu0 %2206
        %2208 = vrot.lane.b32.xlu0 %v2135, 32
        %v2209 = vpop.permute.xlu0 %2208
        %2210 = vrot.lane.b32.xlu0 %v2136, 32
        %v2211 = vpop.permute.xlu0 %2210
        %2212 = vrot.lane.b32.xlu0 %v2137, 32
        %v2213 = vpop.permute.xlu0 %2212
        %2214 = vrot.lane.b32.xlu0 %v2138, 32
        %v2215 = vpop.permute.xlu0 %2214
        %2216 = vrot.lane.b32.xlu0 %v2139, 32
        %v2217 = vpop.permute.xlu0 %2216
        %2218 = vrot.lane.b32.xlu0 %v2140, 32
        %v2219 = vpop.permute.xlu0 %2218
        %2220 = vrot.lane.b32.xlu0 %v2141, 32
        %v2221 = vpop.permute.xlu0 %2220
        %2222 = vrot.lane.b32.xlu0 %v2142, 32
        %v2223 = vpop.permute.xlu0 %2222
        %2224 = vrot.lane.b32.xlu0 %v2143, 32
        %v2225 = vpop.permute.xlu0 %2224
        %2226 = vrot.lane.b32.xlu0 %v2144, 32
        %v2227 = vpop.permute.xlu0 %2226
        %2228 = vrot.lane.b32.xlu0 %v2145, 32
        %v2229 = vpop.permute.xlu0 %2228
        %2230 = vrot.lane.b32.xlu0 %v2146, 32
        %v2231 = vpop.permute.xlu0 %2230
        %2232 = vrot.lane.b32.xlu0 %v2147, 32
        %v2233 = vpop.permute.xlu0 %2232
        %2234 = vrot.lane.b32.xlu0 %v2148, 32
        %v2235 = vpop.permute.xlu0 %2234
        %2236 = vrot.lane.b32.xlu0 %v2149, 32
        %v2237 = vpop.permute.xlu0 %2236
        %2238 = vrot.lane.b32.xlu0 %v2150, 32
        %v2239 = vpop.permute.xlu0 %2238
        %2240 = vrot.lane.b32.xlu0 %v2151, 32
        %v2241 = vpop.permute.xlu0 %2240
        %2242 = vrot.lane.b32.xlu0 %v2152, 32
        %v2243 = vpop.permute.xlu0 %2242
        %2244 = vrot.lane.b32.xlu0 %v2153, 32
        %v2245 = vpop.permute.xlu0 %2244
        %2246 = vrot.lane.b32.xlu0 %v2154, 32
        %v2247 = vpop.permute.xlu0 %2246
        %2248 = vrot.lane.b32.xlu0 %v2155, 32
        %v2249 = vpop.permute.xlu0 %2248
        %2250 = vrot.lane.b32.xlu0 %v2156, 32
        %v2251 = vpop.permute.xlu0 %2250
        %2252 = vrot.lane.b32.xlu0 %v2157, 32
        %v2253 = vpop.permute.xlu0 %2252
        %v2286 = vadd.f32 %v1966, %v2191
        %v2287 = vadd.f32 %v1967, %v2193
        %v2288 = vadd.f32 %v1968, %v2195
        %v2289 = vadd.f32 %v1969, %v2197
        %v2290 = vadd.f32 %v1970, %v2199
        %v2291 = vadd.f32 %v1971, %v2201
        %v2292 = vadd.f32 %v1972, %v2203
        %v2293 = vadd.f32 %v1973, %v2205
        %v2294 = vadd.f32 %v1974, %v2207
        %v2295 = vadd.f32 %v1975, %v2209
        %v2296 = vadd.f32 %v1976, %v2211
        %v2297 = vadd.f32 %v1977, %v2213
        %v2298 = vadd.f32 %v1978, %v2215
        %v2299 = vadd.f32 %v1979, %v2217
        %v2300 = vadd.f32 %v1980, %v2219
        %v2301 = vadd.f32 %v1981, %v2221
        %v2302 = vadd.f32 %v1982, %v2223
        %v2303 = vadd.f32 %v1983, %v2225
        %v2304 = vadd.f32 %v1984, %v2227
        %v2305 = vadd.f32 %v1985, %v2229
        %v2306 = vadd.f32 %v1986, %v2231
        %v2307 = vadd.f32 %v1987, %v2233
        %v2308 = vadd.f32 %v1988, %v2235
        %v2309 = vadd.f32 %v1989, %v2237
        %v2310 = vadd.f32 %v1990, %v2239
        %v2311 = vadd.f32 %v1991, %v2241
        %v2312 = vadd.f32 %v1992, %v2243
        %v2313 = vadd.f32 %v1993, %v2245
        %v2314 = vadd.f32 %v1994, %v2247
        %v2315 = vadd.f32 %v1995, %v2249
        %v2316 = vadd.f32 %v1996, %v2251
        %v2317 = vadd.f32 %v1997, %v2253
        %v2318 = vtanh.pop %v2286
        %v2319 = vtanh.pop %v2287
        %v2320 = vtanh.pop %v2288
        %v2321 = vtanh.pop %v2289
        %v2322 = vtanh.pop %v2290
        %v2323 = vtanh.pop %v2291
        %v2324 = vtanh.pop %v2292
        %v2325 = vtanh.pop %v2293
        %v2326 = vtanh.pop %v2294
        %v2327 = vtanh.pop %v2295
        %v2328 = vtanh.pop %v2296
        %v2329 = vtanh.pop %v2297
        %v2330 = vtanh.pop %v2298
        %v2331 = vtanh.pop %v2299
        %v2332 = vtanh.pop %v2300
        %v2333 = vtanh.pop %v2301
        %v2334 = vtanh.pop %v2302
        %v2335 = vtanh.pop %v2303
        %v2336 = vtanh.pop %v2304
        %v2337 = vtanh.pop %v2305
        %v2338 = vtanh.pop %v2306
        %v2339 = vtanh.pop %v2307
        %v2340 = vtanh.pop %v2308
        %v2341 = vtanh.pop %v2309
        %v2342 = vtanh.pop %v2310
        %v2343 = vtanh.pop %v2311
        %v2344 = vtanh.pop %v2312
        %v2345 = vtanh.pop %v2313
        %v2346 = vtanh.pop %v2314
        %v2347 = vtanh.pop %v2315
        %v2348 = vtanh.pop %v2316
        %v2349 = vtanh.pop %v2317
        %2382 = vrot.lane.b32.xlu0 %v2318, 64
        %v2383 = vpop.permute.xlu0 %2382
        %2384 = vrot.lane.b32.xlu0 %v2319, 64
        %v2385 = vpop.permute.xlu0 %2384
        %2386 = vrot.lane.b32.xlu0 %v2320, 64
        %v2387 = vpop.permute.xlu0 %2386
        %2388 = vrot.lane.b32.xlu0 %v2321, 64
        %v2389 = vpop.permute.xlu0 %2388
        %2390 = vrot.lane.b32.xlu0 %v2322, 64
        %v2391 = vpop.permute.xlu0 %2390
        %2392 = vrot.lane.b32.xlu0 %v2323, 64
        %v2393 = vpop.permute.xlu0 %2392
        %2394 = vrot.lane.b32.xlu0 %v2324, 64
        %v2395 = vpop.permute.xlu0 %2394
        %2396 = vrot.lane.b32.xlu0 %v2325, 64
        %v2397 = vpop.permute.xlu0 %2396
        %2398 = vrot.lane.b32.xlu0 %v2326, 64
        %v2399 = vpop.permute.xlu0 %2398
        %2400 = vrot.lane.b32.xlu0 %v2327, 64
        %v2401 = vpop.permute.xlu0 %2400
        %2402 = vrot.lane.b32.xlu0 %v2328, 64
        %v2403 = vpop.permute.xlu0 %2402
        %2404 = vrot.lane.b32.xlu0 %v2329, 64
        %v2405 = vpop.permute.xlu0 %2404
        %2406 = vrot.lane.b32.xlu0 %v2330, 64
        %v2407 = vpop.permute.xlu0 %2406
        %2408 = vrot.lane.b32.xlu0 %v2331, 64
        %v2409 = vpop.permute.xlu0 %2408
        %2410 = vrot.lane.b32.xlu0 %v2332, 64
        %v2411 = vpop.permute.xlu0 %2410
        %2412 = vrot.lane.b32.xlu0 %v2333, 64
        %v2413 = vpop.permute.xlu0 %2412
        %2414 = vrot.lane.b32.xlu0 %v2334, 64
        %v2415 = vpop.permute.xlu0 %2414
        %2416 = vrot.lane.b32.xlu0 %v2335, 64
        %v2417 = vpop.permute.xlu0 %2416
        %2418 = vrot.lane.b32.xlu0 %v2336, 64
        %v2419 = vpop.permute.xlu0 %2418
        %2420 = vrot.lane.b32.xlu0 %v2337, 64
        %v2421 = vpop.permute.xlu0 %2420
        %2422 = vrot.lane.b32.xlu0 %v2338, 64
        %v2423 = vpop.permute.xlu0 %2422
        %2424 = vrot.lane.b32.xlu0 %v2339, 64
        %v2425 = vpop.permute.xlu0 %2424
        %2426 = vrot.lane.b32.xlu0 %v2340, 64
        %v2427 = vpop.permute.xlu0 %2426
        %2428 = vrot.lane.b32.xlu0 %v2341, 64
        %v2429 = vpop.permute.xlu0 %2428
        %2430 = vrot.lane.b32.xlu0 %v2342, 64
        %v2431 = vpop.permute.xlu0 %2430
        %2432 = vrot.lane.b32.xlu0 %v2343, 64
        %v2433 = vpop.permute.xlu0 %2432
        %2434 = vrot.lane.b32.xlu0 %v2344, 64
        %v2435 = vpop.permute.xlu0 %2434
        %2436 = vrot.lane.b32.xlu0 %v2345, 64
        %v2437 = vpop.permute.xlu0 %2436
        %2438 = vrot.lane.b32.xlu0 %v2346, 64
        %v2439 = vpop.permute.xlu0 %2438
        %2440 = vrot.lane.b32.xlu0 %v2347, 64
        %v2441 = vpop.permute.xlu0 %2440
        %2442 = vrot.lane.b32.xlu0 %v2348, 64
        %v2443 = vpop.permute.xlu0 %2442
        %2444 = vrot.lane.b32.xlu0 %v2349, 64
        %v2445 = vpop.permute.xlu0 %2444
        %v2478 = vmul.f32 %v1711, %v2383
        %v2479 = vmul.f32 %v1713, %v2385
        %v2480 = vmul.f32 %v1715, %v2387
        %v2481 = vmul.f32 %v1717, %v2389
        %v2482 = vmul.f32 %v1719, %v2391
        %v2483 = vmul.f32 %v1721, %v2393
        %v2484 = vmul.f32 %v1723, %v2395
        %v2485 = vmul.f32 %v1725, %v2397
        %v2486 = vmul.f32 %v1727, %v2399
        %v2487 = vmul.f32 %v1729, %v2401
        %v2488 = vmul.f32 %v1731, %v2403
        %v2489 = vmul.f32 %v1733, %v2405
        %v2490 = vmul.f32 %v1735, %v2407
        %v2491 = vmul.f32 %v1737, %v2409
        %v2492 = vmul.f32 %v1739, %v2411
        %v2493 = vmul.f32 %v1741, %v2413
        %v2494 = vmul.f32 %v1743, %v2415
        %v2495 = vmul.f32 %v1745, %v2417
        %v2496 = vmul.f32 %v1747, %v2419
        %v2497 = vmul.f32 %v1749, %v2421
        %v2498 = vmul.f32 %v1751, %v2423
        %v2499 = vmul.f32 %v1753, %v2425
        %v2500 = vmul.f32 %v1755, %v2427
        %v2501 = vmul.f32 %v1757, %v2429
        %v2502 = vmul.f32 %v1759, %v2431
        %v2503 = vmul.f32 %v1761, %v2433
        %v2504 = vmul.f32 %v1763, %v2435
        %v2505 = vmul.f32 %v1765, %v2437
        %v2506 = vmul.f32 %v1767, %v2439
        %v2507 = vmul.f32 %v1769, %v2441
        %v2508 = vmul.f32 %v1771, %v2443
        %v2509 = vmul.f32 %v1773, %v2445
        %2542 = vrot.lane.b32.xlu0 %v2478, 32
        %v2543 = vpop.permute.xlu0 %2542
        %2544 = vrot.lane.b32.xlu0 %v2479, 32
        %v2545 = vpop.permute.xlu0 %2544
        %2546 = vrot.lane.b32.xlu0 %v2480, 32
        %v2547 = vpop.permute.xlu0 %2546
        %2548 = vrot.lane.b32.xlu0 %v2481, 32
        %v2549 = vpop.permute.xlu0 %2548
        %2550 = vrot.lane.b32.xlu0 %v2482, 32
        %v2551 = vpop.permute.xlu0 %2550
        %2552 = vrot.lane.b32.xlu0 %v2483, 32
        %v2553 = vpop.permute.xlu0 %2552
        %2554 = vrot.lane.b32.xlu0 %v2484, 32
        %v2555 = vpop.permute.xlu0 %2554
        %2556 = vrot.lane.b32.xlu0 %v2485, 32
        %v2557 = vpop.permute.xlu0 %2556
        %2558 = vrot.lane.b32.xlu0 %v2486, 32
        %v2559 = vpop.permute.xlu0 %2558
        %2560 = vrot.lane.b32.xlu0 %v2487, 32
        %v2561 = vpop.permute.xlu0 %2560
        %2562 = vrot.lane.b32.xlu0 %v2488, 32
        %v2563 = vpop.permute.xlu0 %2562
        %2564 = vrot.lane.b32.xlu0 %v2489, 32
        %v2565 = vpop.permute.xlu0 %2564
        %2566 = vrot.lane.b32.xlu0 %v2490, 32
        %v2567 = vpop.permute.xlu0 %2566
        %2568 = vrot.lane.b32.xlu0 %v2491, 32
        %v2569 = vpop.permute.xlu0 %2568
        %2570 = vrot.lane.b32.xlu0 %v2492, 32
        %v2571 = vpop.permute.xlu0 %2570
        %2572 = vrot.lane.b32.xlu0 %v2493, 32
        %v2573 = vpop.permute.xlu0 %2572
        %2574 = vrot.lane.b32.xlu0 %v2494, 32
        %v2575 = vpop.permute.xlu0 %2574
        %2576 = vrot.lane.b32.xlu0 %v2495, 32
        %v2577 = vpop.permute.xlu0 %2576
        %2578 = vrot.lane.b32.xlu0 %v2496, 32
        %v2579 = vpop.permute.xlu0 %2578
        %2580 = vrot.lane.b32.xlu0 %v2497, 32
        %v2581 = vpop.permute.xlu0 %2580
        %2582 = vrot.lane.b32.xlu0 %v2498, 32
        %v2583 = vpop.permute.xlu0 %2582
        %2584 = vrot.lane.b32.xlu0 %v2499, 32
        %v2585 = vpop.permute.xlu0 %2584
        %2586 = vrot.lane.b32.xlu0 %v2500, 32
        %v2587 = vpop.permute.xlu0 %2586
        %2588 = vrot.lane.b32.xlu0 %v2501, 32
        %v2589 = vpop.permute.xlu0 %2588
        %2590 = vrot.lane.b32.xlu0 %v2502, 32
        %v2591 = vpop.permute.xlu0 %2590
        %2592 = vrot.lane.b32.xlu0 %v2503, 32
        %v2593 = vpop.permute.xlu0 %2592
        %2594 = vrot.lane.b32.xlu0 %v2504, 32
        %v2595 = vpop.permute.xlu0 %2594
        %2596 = vrot.lane.b32.xlu0 %v2505, 32
        %v2597 = vpop.permute.xlu0 %2596
        %2598 = vrot.lane.b32.xlu0 %v2506, 32
        %v2599 = vpop.permute.xlu0 %2598
        %2600 = vrot.lane.b32.xlu0 %v2507, 32
        %v2601 = vpop.permute.xlu0 %2600
        %2602 = vrot.lane.b32.xlu0 %v2508, 32
        %v2603 = vpop.permute.xlu0 %2602
        %2604 = vrot.lane.b32.xlu0 %v2509, 32
        %v2605 = vpop.permute.xlu0 %2604
        %vm2638 = vcmask 261120
        %v2639 = vsel %vm2638, %v2543, %v2286
        %v2640 = vsel %vm2638, %v2545, %v2287
        %v2641 = vsel %vm2638, %v2547, %v2288
        %v2642 = vsel %vm2638, %v2549, %v2289
        %v2643 = vsel %vm2638, %v2551, %v2290
        %v2644 = vsel %vm2638, %v2553, %v2291
        %v2645 = vsel %vm2638, %v2555, %v2292
        %v2646 = vsel %vm2638, %v2557, %v2293
        %v2647 = vsel %vm2638, %v2559, %v2294
        %v2648 = vsel %vm2638, %v2561, %v2295
        %v2649 = vsel %vm2638, %v2563, %v2296
        %v2650 = vsel %vm2638, %v2565, %v2297
        %v2651 = vsel %vm2638, %v2567, %v2298
        %v2652 = vsel %vm2638, %v2569, %v2299
        %v2653 = vsel %vm2638, %v2571, %v2300
        %v2654 = vsel %vm2638, %v2573, %v2301
        %v2655 = vsel %vm2638, %v2575, %v2302
        %v2656 = vsel %vm2638, %v2577, %v2303
        %v2657 = vsel %vm2638, %v2579, %v2304
        %v2658 = vsel %vm2638, %v2581, %v2305
        %v2659 = vsel %vm2638, %v2583, %v2306
        %v2660 = vsel %vm2638, %v2585, %v2307
        %v2661 = vsel %vm2638, %v2587, %v2308
        %v2662 = vsel %vm2638, %v2589, %v2309
        %v2663 = vsel %vm2638, %v2591, %v2310
        %v2664 = vsel %vm2638, %v2593, %v2311
        %v2665 = vsel %vm2638, %v2595, %v2312
        %v2666 = vsel %vm2638, %v2597, %v2313
        %v2667 = vsel %vm2638, %v2599, %v2314
        %v2668 = vsel %vm2638, %v2601, %v2315
        %v2669 = vsel %vm2638, %v2603, %v2316
        %v2670 = vsel %vm2638, %v2605, %v2317
        %vm2671 = vcmask 523264
        %2672 = vst.msk [vmem:[%s329] sm:$0xff] %vm2671, %v2639
        %2673 = vst.msk [vmem:[%s329 + $0x8] sm:$0xff] %vm2671, %v2640
        %2674 = vst.msk [vmem:[%s329 + $0x10] sm:$0xff] %vm2671, %v2641
        %2675 = vst.msk [vmem:[%s329 + $0x18] sm:$0xff] %vm2671, %v2642
        %2676 = vst.msk [vmem:[%s329 + $0x20] sm:$0xff] %vm2671, %v2643
        %2677 = vst.msk [vmem:[%s329 + $0x28] sm:$0xff] %vm2671, %v2644
        %2678 = vst.msk [vmem:[%s329 + $0x30] sm:$0xff] %vm2671, %v2645
        %2679 = vst.msk [vmem:[%s329 + $0x38] sm:$0xff] %vm2671, %v2646
        %2680 = vst.msk [vmem:[%s329 + $0x40] sm:$0xff] %vm2671, %v2647
        %2681 = vst.msk [vmem:[%s329 + $0x48] sm:$0xff] %vm2671, %v2648
        %2682 = vst.msk [vmem:[%s329 + $0x50] sm:$0xff] %vm2671, %v2649
        %2683 = vst.msk [vmem:[%s329 + $0x58] sm:$0xff] %vm2671, %v2650
        %2684 = vst.msk [vmem:[%s329 + $0x60] sm:$0xff] %vm2671, %v2651
        %2685 = vst.msk [vmem:[%s329 + $0x68] sm:$0xff] %vm2671, %v2652
        %2686 = vst.msk [vmem:[%s329 + $0x70] sm:$0xff] %vm2671, %v2653
        %2687 = vst.msk [vmem:[%s329 + $0x78] sm:$0xff] %vm2671, %v2654
        %2688 = vst.msk [vmem:[%s329 + $0x80] sm:$0xff] %vm2671, %v2655
        %2689 = vst.msk [vmem:[%s329 + $0x88] sm:$0xff] %vm2671, %v2656
        %2690 = vst.msk [vmem:[%s329 + $0x90] sm:$0xff] %vm2671, %v2657
        %2691 = vst.msk [vmem:[%s329 + $0x98] sm:$0xff] %vm2671, %v2658
        %2692 = vst.msk [vmem:[%s329 + $0xa0] sm:$0xff] %vm2671, %v2659
        %2693 = vst.msk [vmem:[%s329 + $0xa8] sm:$0xff] %vm2671, %v2660
        %2694 = vst.msk [vmem:[%s329 + $0xb0] sm:$0xff] %vm2671, %v2661
        %2695 = vst.msk [vmem:[%s329 + $0xb8] sm:$0xff] %vm2671, %v2662
        %2696 = vst.msk [vmem:[%s329 + $0xc0] sm:$0xff] %vm2671, %v2663
        %2697 = vst.msk [vmem:[%s329 + $0xc8] sm:$0xff] %vm2671, %v2664
        %2698 = vst.msk [vmem:[%s329 + $0xd0] sm:$0xff] %vm2671, %v2665
        %2699 = vst.msk [vmem:[%s329 + $0xd8] sm:$0xff] %vm2671, %v2666
        %2700 = vst.msk [vmem:[%s329 + $0xe0] sm:$0xff] %vm2671, %v2667
        %2701 = vst.msk [vmem:[%s329 + $0xe8] sm:$0xff] %vm2671, %v2668
        %2702 = vst.msk [vmem:[%s329 + $0xf0] sm:$0xff] %vm2671, %v2669
        %2703 = vst.msk [vmem:[%s329 + $0xf8] sm:$0xff] %vm2671, %v2670
        %s2704 = smul.u32 32, %s20
        %p2705 = scmp.lt.s32.totalorder %s2704, 63
        %s2706 = scalar_select %p2705, %s2704, 63
        %s2707 = smul.addr %s2706, 8
        %s2708 = scalar_lea.vmem %s5, %s2707
        // Predicated region
        $region49: #{tpu_custom_call.1} parent=39 // pred_check
          %p2709 = pneg %p163
        $region50: #{tpu_custom_call.1} parent=39 // pred_check_branch
          %2711 = sbr.rel (%p2709) target = $region52
        $region51: #{tpu_custom_call.1} parent=39 // pred_region
          %s2712 = smul.u32 32, %s20
        $region52: #{tpu_custom_call.1} parent=39 // pred_fallthru
          _
      $region40: #{tpu_custom_call.1} parent=5 // pred_fallthru
        _
      %p2713 = scmp.le.s32.totalorder 2, %s15
      // Predicated region
      $region53: #{tpu_custom_call.1} parent=5 // pred_check
        %p2714 = pneg %p2713
      $region54: #{tpu_custom_call.1} parent=5 // pred_check_branch
        %2716 = sbr.rel (%p2714) target = $region56
      $region55: #{tpu_custom_call.1} parent=5 // pred_region
        %s2717 = ssub.s32 %s15, 2
        // Predicated region
        $region57: #{tpu_custom_call.1} parent=55 // pred_check
          %p2718 = pneg %p169
        $region58: #{tpu_custom_call.1} parent=55 // pred_check_branch
          %2720 = sbr.rel (%p2718) target = $region60
        $region59: #{tpu_custom_call.1} parent=55 // pred_region
          %s2721 = smul.u32 32, %s21
          %p2722 = scmp.lt.s32.totalorder %s2721, 63
          %s2723 = scalar_select %p2722, %s2721, 63
          %s2724 = smul.addr %s2723, 8
          %s2725 = scalar_lea.vmem %s5, %s2724
        $region60: #{tpu_custom_call.1} parent=55 // pred_fallthru
          _
      $region56: #{tpu_custom_call.1} parent=5 // pred_fallthru
        _
    $region6: #{tpu_custom_call.1} parent=1 // loop_footer
      %s19 = sadd.s32 1, %s15
    $region7: #{tpu_custom_call.1} parent=1 // loop_footer_branch
      %14 = sbr.rel target = $region3
    $region8: #{tpu_custom_call.1} parent=1 // loop_exit
      _
    %2726 = vsyncpa [#allocation3], 1
    %s2727 = scalar_lea.sflag [#allocation3], 1
    %2728 = vsyncpa %s2727, 1
    %2729 = vsyncpa [#allocation5], 1
    %s2730 = scalar_lea.sflag [#allocation5], 1
    %2731 = vsyncpa %s2730, 1

</llo_original>
